<compile_context>
chip_gen: v5e
topology: v5e:2x2
jax: 0.10.0
libtpu: 0.0.40
codegen_flags: <defaults>
</compile_context>

<pallas_src>
import jax
import jax.numpy as jnp
from jax.experimental import pallas as pl
from jax.experimental.pallas import tpu as pltpu

LANE = 128          # TPU lane width; all channel dims are padded to a multiple
VMEM_LIMIT = 32 * 1024 * 1024


def _cpad(c):
    return ((c + LANE - 1) // LANE) * LANE


# ----------------------------------------------------------------------------
# Pallas kernels (built per conv/pool "plan" via closures; all indices static)
# ----------------------------------------------------------------------------
def _make_conv_kernel(num_x, taps, L, relu, has_res):
    """Fused conv (sum of shifted-slab matmuls) + bias (+residual) (+ReLU).

    refs = (*slab_refs, w_ref, b_ref, [res_ref], out_ref)
      slab_ref : (1, Lx_i, Cin)   bf16   flattened spatially-padded activation
      w_ref    : (T, Cin, Coutp)  bf16   per-tap weight matrices (BN folded)
      b_ref    : (1, Coutp)       f32    folded BN bias
      res_ref  : (1, L, Coutp)    bf16   residual, already on the output grid
      out_ref  : (1, L, Coutp)    bf16
    """
    def kernel(*refs):
        x_vals = [refs[i][0] for i in range(num_x)]          # (Lx_i, Cin)
        w = refs[num_x][...]                                 # (T, Cin, Coutp)
        b = refs[num_x + 1][...]                             # (1, Coutp) f32
        r_ref = refs[num_x + 2] if has_res else None
        o_ref = refs[num_x + 2 + (1 if has_res else 0)]

        acc = None
        for t, (xi, off) in enumerate(taps):
            lhs = x_vals[xi][off:off + L, :]                 # (L, Cin) bf16
            part = jnp.dot(lhs, w[t], preferred_element_type=jnp.float32)
            acc = part if acc is None else acc + part
        out = acc + b
        if has_res:
            out = out + r_ref[0].astype(jnp.float32)
        if relu:
            out = jnp.maximum(out, 0.0)
        o_ref[0] = out.astype(o_ref.dtype)

    return kernel


def _make_maxpool_kernel(num_x, taps, L):
    """Max over 9 shifted slab slices (3x3 / stride 2 / pad 1)."""
    def kernel(*refs):
        x_vals = [refs[i][0] for i in range(num_x)]
        o_ref = refs[num_x]
        acc = None
        for xi, off in taps:
            v = x_vals[xi][off:off + L, :]
            acc = v if acc is None else jnp.maximum(acc, v)
        o_ref[0] = acc

    return kernel


# ----------------------------------------------------------------------------
# Wrapper-side slab / tap planning (plain-JAX glue, ~1x copies)
# ----------------------------------------------------------------------------
def _stride2_plan(x, pad_value):
    """3x3 / stride-2 / pad-1 plan: 2x2 phase decomposition + flat slabs.

    Returns (slabs, taps, L, Ho, Wo, Wq):
      slabs : list of (N, Hq*Wq, C) flattened phase arrays
      taps  : tuple of (slab_index, flat_offset) for the 9 taps
      L     : length of the flat output grid per image (= Ho * Wq)
      valid output columns are [0, Wo); column Wo is wrap-around garbage.
    """
    N, H, W, C = x.shape
    Ho = (H - 1) // 2 + 1
    Wo = (W - 1) // 2 + 1
    Hq, Wq = Ho + 2, Wo + 1           # +guard rows / +1 garbage column
    xp = jnp.pad(x, ((0, 0), (1, 1), (1, 1), (0, 0)), constant_values=pad_value)
    slabs = []
    for a in range(2):
        for b in range(2):
            ph = xp[:, a::2, b::2, :]
            ph = jnp.pad(
                ph,
                ((0, 0), (0, Hq - ph.shape[1]), (0, Wq - ph.shape[2]), (0, 0)),
                constant_values=pad_value)
            slabs.append(ph.reshape(N, Hq * Wq, C))
    taps = tuple((2 * (ki % 2) + (kj % 2), (ki // 2) * Wq + (kj // 2))
                 for ki in range(3) for kj in range(3))
    return slabs, taps, Ho * Wq, Ho, Wo, Wq


def conv_bn_act(x, p, stride, relu=True, residual=None):
    """Fused Conv2d + folded-BN (+ residual) (+ ReLU).  x: (N,H,W,Cin) bf16."""
    N, H, W, Cin = x.shape
    k = p["k"]
    Coutp = p["w"].shape[2]

    if k == 1:
        if stride > 1:
            x = x[:, ::stride, ::stride, :]
        Ho, Wo = x.shape[1], x.shape[2]
        Wg = Wo
        L = Ho * Wo
        slabs = [x.reshape(N, L, Cin)]
        taps = ((0, 0),)
    elif stride == 1:                          # 3x3, stride 1, pad 1
        Ho, Wo = H, W
        Wg = W + 2
        xp = jnp.pad(x, ((0, 0), (1, 2), (1, 1), (0, 0)))   # +1 guard row
        slabs = [xp.reshape(N, (H + 3) * Wg, Cin)]
        taps = tuple((0, ki * Wg + kj) for ki in range(3) for kj in range(3))
        L = Ho * Wg
    else:                                      # 3x3, stride 2, pad 1
        slabs, taps, L, Ho, Wo, Wg = _stride2_plan(x, 0.0)

    args = list(slabs) + [p["w"], p["b"]]
    in_specs = [pl.BlockSpec((1,) + s.shape[1:], lambda n: (n, 0, 0))
                for s in slabs]
    in_specs += [pl.BlockSpec(p["w"].shape, lambda n: (0, 0, 0)),
                 pl.BlockSpec(p["b"].shape, lambda n: (0, 0))]
    if residual is not None:
        r = residual
        if Wg != r.shape[2]:
            r = jnp.pad(r, ((0, 0), (0, 0), (0, Wg - r.shape[2]), (0, 0)))
        args.append(r.reshape(N, L, Coutp))
        in_specs.append(pl.BlockSpec((1, L, Coutp), lambda n: (n, 0, 0)))

    kernel = _make_conv_kernel(len(slabs), taps, L, relu, residual is not None)
    out = pl.pallas_call(
        kernel,
        out_shape=jax.ShapeDtypeStruct((N, L, Coutp), jnp.bfloat16),
        grid=(N,),
        in_specs=in_specs,
        out_specs=pl.BlockSpec((1, L, Coutp), lambda n: (n, 0, 0)),
        compiler_params=pltpu.CompilerParams(
            dimension_semantics=("parallel",),
            vmem_limit_bytes=VMEM_LIMIT),
    )(*args)

    out = out.reshape(N, Ho, Wg, Coutp)
    if Wg != Wo:
        out = out[:, :, :Wo, :]                # drop wrap-around garbage cols
    return out


def maxpool_3x3_s2(x):
    """MaxPool2d(kernel=3, stride=2, padding=1, ceil_mode=False)."""
    N, H, W, C = x.shape
    slabs, taps, L, Ho, Wo, Wq = _stride2_plan(x, -jnp.inf)
    kernel = _make_maxpool_kernel(len(slabs), taps, L)
    in_specs = [pl.BlockSpec((1,) + s.shape[1:], lambda n: (n, 0, 0))
                for s in slabs]
    out = pl.pallas_call(
        kernel,
        out_shape=jax.ShapeDtypeStruct((N, L, C), x.dtype),
        grid=(N,),
        in_specs=in_specs,
        out_specs=pl.BlockSpec((1, L, C), lambda n: (n, 0, 0)),
        compiler_params=pltpu.CompilerParams(
            dimension_semantics=("parallel",),
            vmem_limit_bytes=VMEM_LIMIT),
    )(*slabs)
    return out.reshape(N, Ho, Wq, C)[:, :, :Wo, :]


# ----------------------------------------------------------------------------
# Parameters (kaiming-normal fan_out init, eval-mode BN folded into weights)
# ----------------------------------------------------------------------------
def _conv_bn_params(key, cin, cout, k, gamma=1.0):
    cinp, coutp = _cpad(cin), _cpad(cout)
    fan_out = cout * k * k
    std = (2.0 / fan_out) ** 0.5
    w = std * jax.random.normal(key, (k * k, cin, cout), dtype=jnp.float32)
    # BN eval: y = gamma*(x-mean)/sqrt(var+eps)+beta with mean=0, var=1, beta=0
    scale = gamma / (1.0 + 1e-5) ** 0.5
    w = w * scale                               # fold BN scale into weights
    w_p = jnp.zeros((k * k, cinp, coutp), jnp.float32)
    w_p = w_p.at[:, :cin, :cout].set(w)
    bias = jnp.zeros((1, coutp), jnp.float32)   # beta - mean*scale == 0 at init
    return {"w": w_p.astype(jnp.bfloat16), "b": bias, "k": k,
            "cin": cin, "cout": cout}


def build_resnet18_params(key, in_channels=3, stem_channels=16, base_channels=16):
    keys = iter(jax.random.split(key, 64))
    params = {}
    sc = stem_channels
    # deep_stem: 3x (conv3x3 + BN + ReLU)
    params["stem"] = [
        _conv_bn_params(next(keys), in_channels, sc // 2, 3),
        _conv_bn_params(next(keys), sc // 2, sc // 2, 3),
        _conv_bn_params(next(keys), sc // 2, sc, 3),
    ]
    stage_blocks = (2, 2, 2, 2)      # resnet18_v1c
    strides = (1, 2, 2, 2)
    layers, out_channels = [], []
    in_c = sc
    for i, nb in enumerate(stage_blocks):
        out_c = base_channels * (2 ** i)
        stage_stride = strides[i]
        blocks = []
        for b in range(nb):
            s = stage_stride if b == 0 else 1
            blk = {
                "conv1": _conv_bn_params(next(keys), in_c, out_c, 3),
                # zero_init_residual=True -> bn2.weight = 0
                "conv2": _conv_bn_params(next(keys), out_c, out_c, 3, gamma=0.0),
                "down": None,
                "stride": s,
            }
            if b == 0 and (stage_stride != 1 or in_c != out_c):
                # downsample: conv1x1(stride) + BN  (avg_down=False for v1c-18)
                blk["down"] = _conv_bn_params(next(keys), in_c, out_c, 1)
            blocks.append(blk)
            in_c = out_c
        layers.append(blocks)
        out_channels.append(out_c)
    params["layers"] = layers
    params["out_channels"] = out_channels
    return params


# ----------------------------------------------------------------------------
# Forward pass (matches ResNet.forward with deep_stem, out_indices=(0,1,2,3))
# ----------------------------------------------------------------------------
def _pad_channels(x):
    c = x.shape[-1]
    cp = _cpad(c)
    if cp != c:
        x = jnp.pad(x, ((0, 0), (0, 0), (0, 0), (0, cp - c)))
    return x


def basic_block_forward(x, blk):
    identity = x
    out = conv_bn_act(x, blk["conv1"], stride=blk["stride"], relu=True)
    if blk["down"] is not None:
        identity = conv_bn_act(x, blk["down"], stride=blk["stride"], relu=False)
    # conv2 + folded bn2 + residual add + relu, fused in one kernel
    out = conv_bn_act(out, blk["conv2"], stride=1, relu=True, residual=identity)
    return out


def resnet_forward(params, x_nchw, out_indices=(0, 1, 2, 3)):
    x = jnp.transpose(x_nchw, (0, 2, 3, 1))            # NCHW -> NHWC
    x = _pad_channels(x).astype(jnp.bfloat16)
    # deep stem
    x = conv_bn_act(x, params["stem"][0], stride=2)
    x = conv_bn_act(x, params["stem"][1], stride=1)
    x = conv_bn_act(x, params["stem"][2], stride=1)
    x = maxpool_3x3_s2(x)
    outs = []
    for i, blocks in enumerate(params["layers"]):
        for blk in blocks:
            x = basic_block_forward(x, blk)
        if i in out_indices:
            c = params["out_channels"][i]
            outs.append(jnp.transpose(x[..., :c], (0, 3, 1, 2)).astype(jnp.float32))
    return tuple(outs)


# ----------------------------------------------------------------------------
# Pure-JAX references for self-checks
# ----------------------------------------------------------------------------
def _reference_conv(x, w, stride, padding):
    k = int(round(w.shape[0] ** 0.5))
    w4 = w.reshape(k, k, w.shape[1], w.shape[2]).astype(jnp.float32)   # HWIO
    return jax.lax.conv_general_dilated(
        x.astype(jnp.float32), w4,
        window_strides=(stride, stride),
        padding=[(padding, padding), (padding, padding)],
        dimension_numbers=("NHWC", "HWIO", "NHWC"))


# ----------------------------------------------------------------------------
if __name__ == "__main__":
    key = jax.random.PRNGKey(0)
    pkey, xkey, k1, k2, k3 = jax.random.split(key, 5)

    # small config consistent with the module (in_channels=3, 4 stages,
    # strides (1,2,2,2)); stem/base channels scaled down to 16 for the demo.
    params = build_resnet18_params(pkey, in_channels=3,
                                   stem_channels=16, base_channels=16)

    # ---- correctness spot-checks of the fused kernels (bf16 tolerance) ------
    xt = jax.random.normal(k1, (2, 16, 16, LANE), jnp.float32).astype(jnp.bfloat16)
    p = params["stem"][1]                                  # 3x3, stride 1
    got = conv_bn_act(xt, p, stride=1, relu=False).astype(jnp.float32)
    ref = _reference_conv(xt, p["w"], 1, 1)
    assert bool(jnp.allclose(got, ref, rtol=5e-2, atol=5e-2)), "3x3/s1 conv mismatch"

    xt2 = jax.random.normal(k2, (2, 8, 8, LANE), jnp.float32).astype(jnp.bfloat16)
    p2 = params["layers"][1][0]["conv1"]                   # 3x3, stride 2
    got2 = conv_bn_act(xt2, p2, stride=2, relu=False).astype(jnp.float32)
    ref2 = _reference_conv(xt2, p2["w"], 2, 1)
    assert bool(jnp.allclose(got2, ref2, rtol=5e-2, atol=5e-2)), "3x3/s2 conv mismatch"

    xt3 = jax.random.normal(k3, (2, 16, 16, LANE), jnp.float32).astype(jnp.bfloat16)
    got3 = maxpool_3x3_s2(xt3).astype(jnp.float32)
    xp3 = jnp.pad(xt3.astype(jnp.float32), ((0, 0), (1, 1), (1, 1), (0, 0)),
                  constant_values=-jnp.inf)
    ref3 = None
    for ki in range(3):
        for kj in range(3):
            t = xp3[:, ki:ki + 15:2, kj:kj + 15:2, :]
            ref3 = t if ref3 is None else jnp.maximum(ref3, t)
    assert bool(jnp.allclose(got3, ref3)), "maxpool mismatch"

    # ---- full forward --------------------------------------------------------
    x = jax.random.normal(xkey, (2, 3, 32, 32), dtype=jnp.float32)
    fwd = jax.jit(lambda inp: resnet_forward(params, inp))
    outs = jax.block_until_ready(fwd(x))

    expected = [(2, 16, 8, 8), (2, 32, 4, 4), (2, 64, 2, 2), (2, 128, 1, 1)]
    assert len(outs) == 4
    for o, e in zip(outs, expected):
        assert tuple(o.shape) == e, (o.shape, e)
        assert bool(jnp.all(jnp.isfinite(o)))

    print("KERNEL_OK")
</pallas_src>

<mosaic_0001>
module attributes {stable_mosaic.version = 11 : i64} {
  func.func @kernel(%arg0: i32, %arg1: memref<1x342x128xbf16, #tpu.memory_space<vmem>>, %arg2: memref<9x128x128xbf16, #tpu.memory_space<vmem>>, %arg3: memref<1x128xf32, #tpu.memory_space<vmem>>, %arg4: memref<1x288x128xbf16, #tpu.memory_space<vmem>>) attributes {dimension_semantics = [#tpu.dimension_semantics<parallel>], iteration_bounds = array<i64: 2>, scalar_prefetch = 0 : i64, scratch_operands = 0 : i64, tpu.core_type = #tpu.core_type<tc>, window_params = [{transform_indices = @transform_0, window_bounds = array<i64: 1, 342, 128>}, {pipeline_mode = #tpu.pipeline_mode<synchronous>, transform_indices = @transform_1, window_bounds = array<i64: 9, 128, 128>}, {pipeline_mode = #tpu.pipeline_mode<synchronous>, transform_indices = @transform_2, window_bounds = array<i64: 1, 128>}, {transform_indices = @transform_3, window_bounds = array<i64: 1, 288, 128>}]} {
    %c0 = arith.constant 0 : index
    %c0_0 = arith.constant 0 : index
    %c0_1 = arith.constant 0 : index
    %0 = vector.load %arg1[%c0, %c0_0, %c0_1] : memref<1x342x128xbf16, #tpu.memory_space<vmem>>, vector<1x342x128xbf16>
    %1 = vector.shape_cast %0 : vector<1x342x128xbf16> to vector<342x128xbf16>
    %c0_2 = arith.constant 0 : index
    %c0_3 = arith.constant 0 : index
    %c0_4 = arith.constant 0 : index
    %2 = vector.load %arg2[%c0_2, %c0_3, %c0_4] : memref<9x128x128xbf16, #tpu.memory_space<vmem>>, vector<9x128x128xbf16>
    %c0_5 = arith.constant 0 : index
    %c0_6 = arith.constant 0 : index
    %3 = vector.load %arg3[%c0_5, %c0_6] : memref<1x128xf32, #tpu.memory_space<vmem>>, vector<1x128xf32>
    %4 = vector.extract_strided_slice %1 {offsets = [0, 0], sizes = [288, 128], strides = [1, 1]} : vector<342x128xbf16> to vector<288x128xbf16>
    %5 = vector.extract_strided_slice %2 {offsets = [0, 0, 0], sizes = [1, 128, 128], strides = [1, 1, 1]} : vector<9x128x128xbf16> to vector<1x128x128xbf16>
    %6 = vector.shape_cast %5 : vector<1x128x128xbf16> to vector<128x128xbf16>
    %cst = arith.constant dense<0.000000e+00> : vector<288x128xf32>
    %7 = tpu.matmul %4, %6, %cst {dimension_numbers = #tpu.dot_dimension_numbers<[1], [0], [0], [1], [0, 0, 1, 1], [], []>} : vector<288x128xbf16>, vector<128x128xbf16>, vector<288x128xf32> -> vector<288x128xf32>
    %8 = vector.extract_strided_slice %1 {offsets = [1, 0], sizes = [288, 128], strides = [1, 1]} : vector<342x128xbf16> to vector<288x128xbf16>
    %9 = vector.extract_strided_slice %2 {offsets = [1, 0, 0], sizes = [1, 128, 128], strides = [1, 1, 1]} : vector<9x128x128xbf16> to vector<1x128x128xbf16>
    %10 = vector.shape_cast %9 : vector<1x128x128xbf16> to vector<128x128xbf16>
    %cst_7 = arith.constant dense<0.000000e+00> : vector<288x128xf32>
    %11 = tpu.matmul %8, %10, %cst_7 {dimension_numbers = #tpu.dot_dimension_numbers<[1], [0], [0], [1], [0, 0, 1, 1], [], []>} : vector<288x128xbf16>, vector<128x128xbf16>, vector<288x128xf32> -> vector<288x128xf32>
    %12 = arith.addf %7, %11 : vector<288x128xf32>
    %13 = vector.extract_strided_slice %1 {offsets = [2, 0], sizes = [288, 128], strides = [1, 1]} : vector<342x128xbf16> to vector<288x128xbf16>
    %14 = vector.extract_strided_slice %2 {offsets = [2, 0, 0], sizes = [1, 128, 128], strides = [1, 1, 1]} : vector<9x128x128xbf16> to vector<1x128x128xbf16>
    %15 = vector.shape_cast %14 : vector<1x128x128xbf16> to vector<128x128xbf16>
    %cst_8 = arith.constant dense<0.000000e+00> : vector<288x128xf32>
    %16 = tpu.matmul %13, %15, %cst_8 {dimension_numbers = #tpu.dot_dimension_numbers<[1], [0], [0], [1], [0, 0, 1, 1], [], []>} : vector<288x128xbf16>, vector<128x128xbf16>, vector<288x128xf32> -> vector<288x128xf32>
    %17 = arith.addf %12, %16 : vector<288x128xf32>
    %18 = vector.extract_strided_slice %1 {offsets = [18, 0], sizes = [288, 128], strides = [1, 1]} : vector<342x128xbf16> to vector<288x128xbf16>
    %19 = vector.extract_strided_slice %2 {offsets = [3, 0, 0], sizes = [1, 128, 128], strides = [1, 1, 1]} : vector<9x128x128xbf16> to vector<1x128x128xbf16>
    %20 = vector.shape_cast %19 : vector<1x128x128xbf16> to vector<128x128xbf16>
    %cst_9 = arith.constant dense<0.000000e+00> : vector<288x128xf32>
    %21 = tpu.matmul %18, %20, %cst_9 {dimension_numbers = #tpu.dot_dimension_numbers<[1], [0], [0], [1], [0, 0, 1, 1], [], []>} : vector<288x128xbf16>, vector<128x128xbf16>, vector<288x128xf32> -> vector<288x128xf32>
    %22 = arith.addf %17, %21 : vector<288x128xf32>
    %23 = vector.extract_strided_slice %1 {offsets = [19, 0], sizes = [288, 128], strides = [1, 1]} : vector<342x128xbf16> to vector<288x128xbf16>
    %24 = vector.extract_strided_slice %2 {offsets = [4, 0, 0], sizes = [1, 128, 128], strides = [1, 1, 1]} : vector<9x128x128xbf16> to vector<1x128x128xbf16>
    %25 = vector.shape_cast %24 : vector<1x128x128xbf16> to vector<128x128xbf16>
    %cst_10 = arith.constant dense<0.000000e+00> : vector<288x128xf32>
    %26 = tpu.matmul %23, %25, %cst_10 {dimension_numbers = #tpu.dot_dimension_numbers<[1], [0], [0], [1], [0, 0, 1, 1], [], []>} : vector<288x128xbf16>, vector<128x128xbf16>, vector<288x128xf32> -> vector<288x128xf32>
    %27 = arith.addf %22, %26 : vector<288x128xf32>
    %28 = vector.extract_strided_slice %1 {offsets = [20, 0], sizes = [288, 128], strides = [1, 1]} : vector<342x128xbf16> to vector<288x128xbf16>
    %29 = vector.extract_strided_slice %2 {offsets = [5, 0, 0], sizes = [1, 128, 128], strides = [1, 1, 1]} : vector<9x128x128xbf16> to vector<1x128x128xbf16>
    %30 = vector.shape_cast %29 : vector<1x128x128xbf16> to vector<128x128xbf16>
    %cst_11 = arith.constant dense<0.000000e+00> : vector<288x128xf32>
    %31 = tpu.matmul %28, %30, %cst_11 {dimension_numbers = #tpu.dot_dimension_numbers<[1], [0], [0], [1], [0, 0, 1, 1], [], []>} : vector<288x128xbf16>, vector<128x128xbf16>, vector<288x128xf32> -> vector<288x128xf32>
    %32 = arith.addf %27, %31 : vector<288x128xf32>
    %33 = vector.extract_strided_slice %1 {offsets = [36, 0], sizes = [288, 128], strides = [1, 1]} : vector<342x128xbf16> to vector<288x128xbf16>
    %34 = vector.extract_strided_slice %2 {offsets = [6, 0, 0], sizes = [1, 128, 128], strides = [1, 1, 1]} : vector<9x128x128xbf16> to vector<1x128x128xbf16>
    %35 = vector.shape_cast %34 : vector<1x128x128xbf16> to vector<128x128xbf16>
    %cst_12 = arith.constant dense<0.000000e+00> : vector<288x128xf32>
    %36 = tpu.matmul %33, %35, %cst_12 {dimension_numbers = #tpu.dot_dimension_numbers<[1], [0], [0], [1], [0, 0, 1, 1], [], []>} : vector<288x128xbf16>, vector<128x128xbf16>, vector<288x128xf32> -> vector<288x128xf32>
    %37 = arith.addf %32, %36 : vector<288x128xf32>
    %38 = vector.extract_strided_slice %1 {offsets = [37, 0], sizes = [288, 128], strides = [1, 1]} : vector<342x128xbf16> to vector<288x128xbf16>
    %39 = vector.extract_strided_slice %2 {offsets = [7, 0, 0], sizes = [1, 128, 128], strides = [1, 1, 1]} : vector<9x128x128xbf16> to vector<1x128x128xbf16>
    %40 = vector.shape_cast %39 : vector<1x128x128xbf16> to vector<128x128xbf16>
    %cst_13 = arith.constant dense<0.000000e+00> : vector<288x128xf32>
    %41 = tpu.matmul %38, %40, %cst_13 {dimension_numbers = #tpu.dot_dimension_numbers<[1], [0], [0], [1], [0, 0, 1, 1], [], []>} : vector<288x128xbf16>, vector<128x128xbf16>, vector<288x128xf32> -> vector<288x128xf32>
    %42 = arith.addf %37, %41 : vector<288x128xf32>
    %43 = vector.extract_strided_slice %1 {offsets = [38, 0], sizes = [288, 128], strides = [1, 1]} : vector<342x128xbf16> to vector<288x128xbf16>
    %44 = vector.extract_strided_slice %2 {offsets = [8, 0, 0], sizes = [1, 128, 128], strides = [1, 1, 1]} : vector<9x128x128xbf16> to vector<1x128x128xbf16>
    %45 = vector.shape_cast %44 : vector<1x128x128xbf16> to vector<128x128xbf16>
    %cst_14 = arith.constant dense<0.000000e+00> : vector<288x128xf32>
    %46 = tpu.matmul %43, %45, %cst_14 {dimension_numbers = #tpu.dot_dimension_numbers<[1], [0], [0], [1], [0, 0, 1, 1], [], []>} : vector<288x128xbf16>, vector<128x128xbf16>, vector<288x128xf32> -> vector<288x128xf32>
    %47 = arith.addf %42, %46 : vector<288x128xf32>
    %48 = vector.broadcast %3 : vector<1x128xf32> to vector<288x128xf32>
    %49 = arith.addf %47, %48 : vector<288x128xf32>
    %50 = arith.truncf %49 : vector<288x128xf32> to vector<288x128xbf16>
    %c0_15 = arith.constant 0 : index
    %c0_16 = arith.constant 0 : index
    %c0_17 = arith.constant 0 : index
    %51 = vector.load %arg4[%c0_15, %c0_16, %c0_17] : memref<1x288x128xbf16, #tpu.memory_space<vmem>>, vector<1x288x128xbf16>
    %52 = vector.shape_cast %51 : vector<1x288x128xbf16> to vector<288x128xbf16>
    %53 = vector.shape_cast %50 : vector<288x128xbf16> to vector<1x288x128xbf16>
    tpu.vector_store %arg4[%c0_15, %c0_16, %c0_17], %53 {strides = array<i32>} : memref<1x288x128xbf16, #tpu.memory_space<vmem>>, vector<1x288x128xbf16>,
    return
  }
  func.func @transform_0(%arg0: i32) -> (i32, i32, i32) {
    %c0_i32 = arith.constant 0 : i32
    %c0_i32_0 = arith.constant 0 : i32
    %c0_i32_1 = arith.constant 0 : i32
    return %arg0, %c0_i32, %c0_i32_0 : i32, i32, i32
  }
  func.func @transform_1(%arg0: i32) -> (i32, i32, i32) {
    %c0_i32 = arith.constant 0 : i32
    %c0_i32_0 = arith.constant 0 : i32
    %c0_i32_1 = arith.constant 0 : i32
    %c0_i32_2 = arith.constant 0 : i32
    return %c0_i32, %c0_i32_0, %c0_i32_1 : i32, i32, i32
  }
  func.func @transform_2(%arg0: i32) -> (i32, i32) {
    %c0_i32 = arith.constant 0 : i32
    %c0_i32_0 = arith.constant 0 : i32
    %c0_i32_1 = arith.constant 0 : i32
    return %c0_i32, %c0_i32_0 : i32, i32
  }
  func.func @transform_3(%arg0: i32) -> (i32, i32, i32) {
    %c0_i32 = arith.constant 0 : i32
    %c0_i32_0 = arith.constant 0 : i32
    %c0_i32_1 = arith.constant 0 : i32
    return %arg0, %c0_i32, %c0_i32_0 : i32, i32, i32
  }
}

</mosaic_0001>

<llo_original>
// kernel: tpu_custom_call.1
$region0: #{tpu_custom_call.1}
  #allocation0 [shape = 'u32[]', space=smem, size = 0x4, offset = 0x4, fixed_abs, tag = 'smem constant byte address 0x4 - core index']
  #allocation1 [shape = 'u32[72,128]{1,0:T(1,128)}', space=vmem, size = 0x9000, scoped, tag = 'internal scratch']
  %s0 = inlined_call_operand.vmem [shape: bf16[2,342,128], index: 0, kind: input, shape index: {}]
  %s1 = inlined_call_operand.vmem [shape: bf16[9,128,128], index: 1, kind: input, shape index: {}]
  %s2 = inlined_call_operand.vmem [shape: f32[1,128], index: 2, kind: input, shape index: {}]
  %s3 = inlined_call_operand.hbm [shape: bf16[2,288,128], index: 3, kind: output, shape index: {}]
  %s4 = sld [smem:[#allocation0]]
  $region45: #{tpu_custom_call.1} parent=0
    _
  %s6 = ssub.s32 1, %s4
  %s7 = scalar_select 0, %s6, %s4
  $region1: #{tpu_custom_call.1} parent=0
    #allocation2 [shape = 'u8[147456]{0}', space=vmem, size = 0x24000, scoped, tag = 'output window, operand 0']
    #allocation3 [shape = 's32[2]{0}', space=sflag, size = 0x8, scoped, tag = 'scoped memory for tpu_custom_call.1']
    %8 = vsyncpa [#allocation3], 0
    %s9 = scalar_lea.sflag [#allocation3], 1
    %10 = vsyncpa %s9, 0
    loop: start=0, step=1, limit=4
    $region2: #{tpu_custom_call.1} parent=1 // loop_pre_header
      _
    $region3: #{tpu_custom_call.1} parent=1 // loop_header
      %s12 = sphi 0, %s16
      %p13 = scmp.ge.s32.totalorder %s12, 4
      %s22 = sphi 0, %s24
      %s25 = sphi 0, %s22
      %s26 = sphi 0, %s25
      %s42 = sphi 0, %s26
      %s46 = sphi 0, %s46
      %s48 = sphi 0, %s46
      %s49 = sphi 0, %s48
      %s63 = sphi 0, %s49
      %s67 = sphi 0, %s67
      %s69 = sphi 0, %s67
      %s70 = sphi 0, %s69
      %s84 = sphi 0, %s70
      %s90 = sphi 0, %s92
      %s93 = sphi 0, %s90
      %s94 = sphi 0, %s93
      %s110 = sphi 0, %s94
    $region4: #{tpu_custom_call.1} parent=1 // loop_header_branch
      %15 = sbr.rel (%p13) target = $region8
    $region5: #{tpu_custom_call.1} parent=1 // loop_body
      %s17 = ssub.s32 %s12, 1
      %s18 = ssub.s32 %s12, 2
      %s19 = sadd.s32 %s12, 1
      %s20 = ssub.s32 %s12, %s19
      %p21 = scmp.eq.s32.totalorder %s20, 0
      %s23 = sadd.s32 %s22, 1
      %s24 = scalar_select %p21, %s22, %s23
      %p27 = pneg %p21
      %p28 = scmp.eq.s32.totalorder %s12, 1
      %p29 = por %p27, %p28
      %p30 = scmp.ne.s32.totalorder %s22, %s25
      %p31 = scmp.eq.s32.totalorder %s12, 0
      %p32 = por %p30, %p31
      %p33 = scmp.ne.s32.totalorder %s22, %s25
      %p34 = scmp.eq.s32.totalorder %s17, 1
      %p35 = por %p33, %p34
      %p36 = scmp.ne.s32.totalorder %s25, %s26
      %p37 = scmp.eq.s32.totalorder %s17, 0
      %p38 = por %p36, %p37
      %p39 = scmp.ne.s32.totalorder %s25, %s26
      %p40 = scmp.eq.s32.totalorder %s18, 1
      %p41 = por %p39, %p40
      %p43 = scmp.ne.s32.totalorder %s26, %s42
      %p44 = scmp.eq.s32.totalorder %s18, 0
      %p45 = por %p43, %p44
      %s47 = sadd.s32 %s46, 1
      %p50 = scmp.eq.s32.totalorder %s12, 1
      %p51 = scmp.ne.s32.totalorder %s46, %s48
      %p52 = scmp.eq.s32.totalorder %s12, 0
      %p53 = por %p51, %p52
      %p54 = scmp.ne.s32.totalorder %s46, %s48
      %p55 = scmp.eq.s32.totalorder %s17, 1
      %p56 = por %p54, %p55
      %p57 = scmp.ne.s32.totalorder %s48, %s49
      %p58 = scmp.eq.s32.totalorder %s17, 0
      %p59 = por %p57, %p58
      %p60 = scmp.ne.s32.totalorder %s48, %s49
      %p61 = scmp.eq.s32.totalorder %s18, 1
      %p62 = por %p60, %p61
      %p64 = scmp.ne.s32.totalorder %s49, %s63
      %p65 = scmp.eq.s32.totalorder %s18, 0
      %p66 = por %p64, %p65
      %s68 = sadd.s32 %s67, 1
      %p71 = scmp.eq.s32.totalorder %s12, 1
      %p72 = scmp.ne.s32.totalorder %s67, %s69
      %p73 = scmp.eq.s32.totalorder %s12, 0
      %p74 = por %p72, %p73
      %p75 = scmp.ne.s32.totalorder %s67, %s69
      %p76 = scmp.eq.s32.totalorder %s17, 1
      %p77 = por %p75, %p76
      %p78 = scmp.ne.s32.totalorder %s69, %s70
      %p79 = scmp.eq.s32.totalorder %s17, 0
      %p80 = por %p78, %p79
      %p81 = scmp.ne.s32.totalorder %s69, %s70
      %p82 = scmp.eq.s32.totalorder %s18, 1
      %p83 = por %p81, %p82
      %p85 = scmp.ne.s32.totalorder %s70, %s84
      %p86 = scmp.eq.s32.totalorder %s18, 0
      %p87 = por %p85, %p86
      %s88 = ssub.s32 %s12, %s19
      %p89 = scmp.eq.s32.totalorder %s88, 0
      %s91 = sadd.s32 %s90, 1
      %s92 = scalar_select %p89, %s90, %s91
      %p95 = pneg %p89
      %p96 = scmp.eq.s32.totalorder %s12, 1
      %p97 = por %p95, %p96
      %p98 = scmp.ne.s32.totalorder %s90, %s93
      %p99 = scmp.eq.s32.totalorder %s12, 0
      %p100 = por %p98, %p99
      %p101 = scmp.ne.s32.totalorder %s90, %s93
      %p102 = scmp.eq.s32.totalorder %s17, 1
      %p103 = por %p101, %p102
      %p104 = scmp.ne.s32.totalorder %s93, %s94
      %p105 = scmp.eq.s32.totalorder %s17, 0
      %p106 = por %p104, %p105
      %p107 = scmp.ne.s32.totalorder %s93, %s94
      %p108 = scmp.eq.s32.totalorder %s18, 1
      %p109 = por %p107, %p108
      %p111 = scmp.ne.s32.totalorder %s94, %s110
      %p112 = scmp.eq.s32.totalorder %s18, 0
      %p113 = por %p111, %p112
      %p114 = scmp.le.s32.totalorder 1, %s12
      %p115 = scmp.lt.s32.totalorder %s12, 3
      %p116 = pnand %p114, %p115
      %p117 = pneg %p116
      // Predicated region
      $region9: #{tpu_custom_call.1} parent=5 // pred_check
        _
      $region10: #{tpu_custom_call.1} parent=5 // pred_check_branch
        %119 = sbr.rel (%p116) target = $region12
      $region11: #{tpu_custom_call.1} parent=5 // pred_region
        %s120 = ssub.s32 %s12, 1
        // Predicated region
        $region13: #{tpu_custom_call.1} parent=11 // pred_check
          %p121 = pneg %p59
        $region14: #{tpu_custom_call.1} parent=11 // pred_check_branch
          %123 = sbr.rel (%p121) target = $region16
        $region15: #{tpu_custom_call.1} parent=11 // pred_region
          _
        $region16: #{tpu_custom_call.1} parent=11 // pred_fallthru
          _
        // Predicated region
        $region17: #{tpu_custom_call.1} parent=11 // pred_check
          %p124 = pneg %p80
        $region18: #{tpu_custom_call.1} parent=11 // pred_check_branch
          %126 = sbr.rel (%p124) target = $region20
        $region19: #{tpu_custom_call.1} parent=11 // pred_region
          _
        $region20: #{tpu_custom_call.1} parent=11 // pred_fallthru
          _
      $region12: #{tpu_custom_call.1} parent=5 // pred_fallthru
        _
      %p127 = scmp.lt.s32.totalorder %s12, 2
      // Predicated region
      $region21: #{tpu_custom_call.1} parent=5 // pred_check
        %p128 = pneg %p127
      $region22: #{tpu_custom_call.1} parent=5 // pred_check_branch
        %130 = sbr.rel (%p128) target = $region24
      $region23: #{tpu_custom_call.1} parent=5 // pred_region
        // Predicated region
        $region25: #{tpu_custom_call.1} parent=23 // pred_check
          %p131 = pneg %p32
        $region26: #{tpu_custom_call.1} parent=23 // pred_check_branch
          %133 = sbr.rel (%p131) target = $region28
        $region27: #{tpu_custom_call.1} parent=23 // pred_region
          %p134 = scmp.lt.s32.totalorder %s12, 1
          %s135 = scalar_select %p134, %s12, 1
          %s136 = smul.addr %s135, 43
          %s137 = smul.addr %s136, 4
          %s138 = scalar_lea.vmem %s0, %s137
        $region28: #{tpu_custom_call.1} parent=23 // pred_fallthru
          _
      $region24: #{tpu_custom_call.1} parent=5 // pred_fallthru
        _
      %p139 = scmp.le.s32.totalorder 1, %s12
      %p140 = scmp.lt.s32.totalorder %s12, 3
      %p141 = pnand %p139, %p140
      %p142 = pneg %p141
      // Predicated region
      $region29: #{tpu_custom_call.1} parent=5 // pred_check
        _
      $region30: #{tpu_custom_call.1} parent=5 // pred_check_branch
        %144 = sbr.rel (%p141) target = $region32
      $region31: #{tpu_custom_call.1} parent=5 // pred_region
        %s145 = ssub.s32 %s12, 1
        %p146 = scmp.lt.s32.totalorder %s17, 1
        %s147 = scalar_select %p146, %s17, 1
        %s148 = smul.addr %s147, 43
        %s149 = smul.addr %s148, 4
        %s150 = scalar_lea.vmem %s0, %s149
        %p151 = pneg %p38
        %p152 = pneg %p35
        %p153 = pneg %p59
        %p154 = pneg %p56
        %p155 = pneg %p80
        %p156 = pneg %p77
        %p157 = pneg %p106
        %p158 = pneg %p103
        %s159 = sand.u32 %s93, 1
        %s160 = scalar_lea.sflag [#allocation3], %s159
        %s161 = sand.u32 %s93, 1
        %s162 = smul.addr %s161, 144
        %s163 = scalar_lea.vmem [#allocation2], %s162
        %p164 = scmp.lt.s32.totalorder %s17, 1
        %s165 = scalar_select %p164, %s17, 1
        %s166 = smul.addr %s165, 43
        %s167 = smul.addr %s166, 4
        %s168 = scalar_lea.vmem %s0, %s167
        %v169 = vld [vmem:[%s168] sm:$0xf]
        %v170 = vld [vmem:[%s168 + $0x4] sm:$0xf]
        %v171 = vld [vmem:[%s168 + $0x8] sm:$0xf]
        %v172 = vld [vmem:[%s168 + $0xc] sm:$0xf]
        %v173 = vld [vmem:[%s168 + $0x10] sm:$0xf]
        %v174 = vld [vmem:[%s168 + $0x14] sm:$0xf]
        %v175 = vld [vmem:[%s168 + $0x18] sm:$0xf]
        %v176 = vld [vmem:[%s168 + $0x1c] sm:$0xf]
        %v177 = vld [vmem:[%s168 + $0x20] sm:$0xf]
        %v178 = vld [vmem:[%s168 + $0x24] sm:$0xf]
        %v179 = vld [vmem:[%s168 + $0x28] sm:$0xf]
        %v180 = vld [vmem:[%s168 + $0x2c] sm:$0xf]
        %v181 = vld [vmem:[%s168 + $0x30] sm:$0xf]
        %v182 = vld [vmem:[%s168 + $0x34] sm:$0xf]
        %v183 = vld [vmem:[%s168 + $0x38] sm:$0xf]
        %v184 = vld [vmem:[%s168 + $0x3c] sm:$0xf]
        %v185 = vld [vmem:[%s168 + $0x40] sm:$0xf]
        %v186 = vld [vmem:[%s168 + $0x44] sm:$0xf]
        %v187 = vld [vmem:[%s168 + $0x48] sm:$0xf]
        %v188 = vld [vmem:[%s168 + $0x4c] sm:$0xf]
        %v189 = vld [vmem:[%s168 + $0x50] sm:$0xf]
        %v190 = vld [vmem:[%s168 + $0x54] sm:$0xf]
        %v191 = vld [vmem:[%s168 + $0x58] sm:$0xf]
        %v192 = vld [vmem:[%s168 + $0x5c] sm:$0xf]
        %v193 = vld [vmem:[%s168 + $0x60] sm:$0xf]
        %v194 = vld [vmem:[%s168 + $0x64] sm:$0xf]
        %v195 = vld [vmem:[%s168 + $0x68] sm:$0xf]
        %v196 = vld [vmem:[%s168 + $0x6c] sm:$0xf]
        %v197 = vld [vmem:[%s168 + $0x70] sm:$0xf]
        %v198 = vld [vmem:[%s168 + $0x74] sm:$0xf]
        %v199 = vld [vmem:[%s168 + $0x78] sm:$0xf]
        %v200 = vld [vmem:[%s168 + $0x7c] sm:$0xf]
        %v201 = vld [vmem:[%s168 + $0x80] sm:$0xf]
        %v202 = vld [vmem:[%s168 + $0x84] sm:$0xf]
        %v203 = vld [vmem:[%s168 + $0x88] sm:$0xf]
        %v204 = vld [vmem:[%s168 + $0x8c] sm:$0xf]
        %v205 = vld [vmem:[%s168 + $0x90] sm:$0xf]
        %v206 = vld [vmem:[%s168 + $0x94] sm:$0xf]
        %v207 = vld [vmem:[%s168 + $0x98] sm:$0xf]
        %v208 = vld [vmem:[%s168 + $0x9c] sm:$0xf]
        %v209 = vld [vmem:[%s168 + $0xa0] sm:$0xf]
        %v210 = vld [vmem:[%s1] sm:$0xf]
        %v211 = vld [vmem:[%s1 + $0x4] sm:$0xf]
        %v212 = vld [vmem:[%s1 + $0x8] sm:$0xf]
        %v213 = vld [vmem:[%s1 + $0xc] sm:$0xf]
        %v214 = vld [vmem:[%s1 + $0x10] sm:$0xf]
        %v215 = vld [vmem:[%s1 + $0x14] sm:$0xf]
        %v216 = vld [vmem:[%s1 + $0x18] sm:$0xf]
        %v217 = vld [vmem:[%s1 + $0x1c] sm:$0xf]
        %v218 = vld [vmem:[%s1 + $0x20] sm:$0xf]
        %v219 = vld [vmem:[%s1 + $0x24] sm:$0xf]
        %v220 = vld [vmem:[%s1 + $0x28] sm:$0xf]
        %v221 = vld [vmem:[%s1 + $0x2c] sm:$0xf]
        %v222 = vld [vmem:[%s1 + $0x30] sm:$0xf]
        %v223 = vld [vmem:[%s1 + $0x34] sm:$0xf]
        %v224 = vld [vmem:[%s1 + $0x38] sm:$0xf]
        %v225 = vld [vmem:[%s1 + $0x3c] sm:$0xf]
        %v226 = vld [vmem:[%s1 + $0x40] sm:$0xf]
        %v227 = vld [vmem:[%s1 + $0x44] sm:$0xf]
        %v228 = vld [vmem:[%s1 + $0x48] sm:$0xf]
        %v229 = vld [vmem:[%s1 + $0x4c] sm:$0xf]
        %v230 = vld [vmem:[%s1 + $0x50] sm:$0xf]
        %v231 = vld [vmem:[%s1 + $0x54] sm:$0xf]
        %v232 = vld [vmem:[%s1 + $0x58] sm:$0xf]
        %v233 = vld [vmem:[%s1 + $0x5c] sm:$0xf]
        %v234 = vld [vmem:[%s1 + $0x60] sm:$0xf]
        %v235 = vld [vmem:[%s1 + $0x64] sm:$0xf]
        %v236 = vld [vmem:[%s1 + $0x68] sm:$0xf]
        %v237 = vld [vmem:[%s1 + $0x6c] sm:$0xf]
        %v238 = vld [vmem:[%s1 + $0x70] sm:$0xf]
        %v239 = vld [vmem:[%s1 + $0x74] sm:$0xf]
        %v240 = vld [vmem:[%s1 + $0x78] sm:$0xf]
        %v241 = vld [vmem:[%s1 + $0x7c] sm:$0xf]
        %v242 = vld [vmem:[%s1 + $0x80] sm:$0xf]
        %v243 = vld [vmem:[%s1 + $0x84] sm:$0xf]
        %v244 = vld [vmem:[%s1 + $0x88] sm:$0xf]
        %v245 = vld [vmem:[%s1 + $0x8c] sm:$0xf]
        %v246 = vld [vmem:[%s1 + $0x90] sm:$0xf]
        %v247 = vld [vmem:[%s1 + $0x94] sm:$0xf]
        %v248 = vld [vmem:[%s1 + $0x98] sm:$0xf]
        %v249 = vld [vmem:[%s1 + $0x9c] sm:$0xf]
        %v250 = vld [vmem:[%s1 + $0xa0] sm:$0xf]
        %v251 = vld [vmem:[%s1 + $0xa4] sm:$0xf]
        %v252 = vld [vmem:[%s1 + $0xa8] sm:$0xf]
        %v253 = vld [vmem:[%s1 + $0xac] sm:$0xf]
        %v254 = vld [vmem:[%s1 + $0xb0] sm:$0xf]
        %v255 = vld [vmem:[%s1 + $0xb4] sm:$0xf]
        %v256 = vld [vmem:[%s1 + $0xb8] sm:$0xf]
        %v257 = vld [vmem:[%s1 + $0xbc] sm:$0xf]
        %v258 = vld [vmem:[%s1 + $0xc0] sm:$0xf]
        %v259 = vld [vmem:[%s1 + $0xc4] sm:$0xf]
        %v260 = vld [vmem:[%s1 + $0xc8] sm:$0xf]
        %v261 = vld [vmem:[%s1 + $0xcc] sm:$0xf]
        %v262 = vld [vmem:[%s1 + $0xd0] sm:$0xf]
        %v263 = vld [vmem:[%s1 + $0xd4] sm:$0xf]
        %v264 = vld [vmem:[%s1 + $0xd8] sm:$0xf]
        %v265 = vld [vmem:[%s1 + $0xdc] sm:$0xf]
        %v266 = vld [vmem:[%s1 + $0xe0] sm:$0xf]
        %v267 = vld [vmem:[%s1 + $0xe4] sm:$0xf]
        %v268 = vld [vmem:[%s1 + $0xe8] sm:$0xf]
        %v269 = vld [vmem:[%s1 + $0xec] sm:$0xf]
        %v270 = vld [vmem:[%s1 + $0xf0] sm:$0xf]
        %v271 = vld [vmem:[%s1 + $0xf4] sm:$0xf]
        %v272 = vld [vmem:[%s1 + $0xf8] sm:$0xf]
        %v273 = vld [vmem:[%s1 + $0xfc] sm:$0xf]
        %v274 = vld [vmem:[%s1 + $0x100] sm:$0xf]
        %v275 = vld [vmem:[%s1 + $0x104] sm:$0xf]
        %v276 = vld [vmem:[%s1 + $0x108] sm:$0xf]
        %v277 = vld [vmem:[%s1 + $0x10c] sm:$0xf]
        %v278 = vld [vmem:[%s1 + $0x110] sm:$0xf]
        %v279 = vld [vmem:[%s1 + $0x114] sm:$0xf]
        %v280 = vld [vmem:[%s1 + $0x118] sm:$0xf]
        %v281 = vld [vmem:[%s1 + $0x11c] sm:$0xf]
        %v282 = vld [vmem:[%s1 + $0x120] sm:$0xf]
        %v283 = vld [vmem:[%s1 + $0x124] sm:$0xf]
        %v284 = vld [vmem:[%s1 + $0x128] sm:$0xf]
        %v285 = vld [vmem:[%s1 + $0x12c] sm:$0xf]
        %v286 = vld [vmem:[%s1 + $0x130] sm:$0xf]
        %v287 = vld [vmem:[%s1 + $0x134] sm:$0xf]
        %v288 = vld [vmem:[%s1 + $0x138] sm:$0xf]
        %v289 = vld [vmem:[%s1 + $0x13c] sm:$0xf]
        %v290 = vld [vmem:[%s1 + $0x140] sm:$0xf]
        %v291 = vld [vmem:[%s1 + $0x144] sm:$0xf]
        %v292 = vld [vmem:[%s1 + $0x148] sm:$0xf]
        %v293 = vld [vmem:[%s1 + $0x14c] sm:$0xf]
        %v294 = vld [vmem:[%s1 + $0x150] sm:$0xf]
        %v295 = vld [vmem:[%s1 + $0x154] sm:$0xf]
        %v296 = vld [vmem:[%s1 + $0x158] sm:$0xf]
        %v297 = vld [vmem:[%s1 + $0x15c] sm:$0xf]
        %v298 = vld [vmem:[%s1 + $0x160] sm:$0xf]
        %v299 = vld [vmem:[%s1 + $0x164] sm:$0xf]
        %v300 = vld [vmem:[%s1 + $0x168] sm:$0xf]
        %v301 = vld [vmem:[%s1 + $0x16c] sm:$0xf]
        %v302 = vld [vmem:[%s1 + $0x170] sm:$0xf]
        %v303 = vld [vmem:[%s1 + $0x174] sm:$0xf]
        %v304 = vld [vmem:[%s1 + $0x178] sm:$0xf]
        %v305 = vld [vmem:[%s1 + $0x17c] sm:$0xf]
        %v306 = vld [vmem:[%s1 + $0x180] sm:$0xf]
        %v307 = vld [vmem:[%s1 + $0x184] sm:$0xf]
        %v308 = vld [vmem:[%s1 + $0x188] sm:$0xf]
        %v309 = vld [vmem:[%s1 + $0x18c] sm:$0xf]
        %v310 = vld [vmem:[%s1 + $0x190] sm:$0xf]
        %v311 = vld [vmem:[%s1 + $0x194] sm:$0xf]
        %v312 = vld [vmem:[%s1 + $0x198] sm:$0xf]
        %v313 = vld [vmem:[%s1 + $0x19c] sm:$0xf]
        %v314 = vld [vmem:[%s1 + $0x1a0] sm:$0xf]
        %v315 = vld [vmem:[%s1 + $0x1a4] sm:$0xf]
        %v316 = vld [vmem:[%s1 + $0x1a8] sm:$0xf]
        %v317 = vld [vmem:[%s1 + $0x1ac] sm:$0xf]
        %v318 = vld [vmem:[%s1 + $0x1b0] sm:$0xf]
        %v319 = vld [vmem:[%s1 + $0x1b4] sm:$0xf]
        %v320 = vld [vmem:[%s1 + $0x1b8] sm:$0xf]
        %v321 = vld [vmem:[%s1 + $0x1bc] sm:$0xf]
        %v322 = vld [vmem:[%s1 + $0x1c0] sm:$0xf]
        %v323 = vld [vmem:[%s1 + $0x1c4] sm:$0xf]
        %v324 = vld [vmem:[%s1 + $0x1c8] sm:$0xf]
        %v325 = vld [vmem:[%s1 + $0x1cc] sm:$0xf]
        %v326 = vld [vmem:[%s1 + $0x1d0] sm:$0xf]
        %v327 = vld [vmem:[%s1 + $0x1d4] sm:$0xf]
        %v328 = vld [vmem:[%s1 + $0x1d8] sm:$0xf]
        %v329 = vld [vmem:[%s1 + $0x1dc] sm:$0xf]
        %v330 = vld [vmem:[%s1 + $0x1e0] sm:$0xf]
        %v331 = vld [vmem:[%s1 + $0x1e4] sm:$0xf]
        %v332 = vld [vmem:[%s1 + $0x1e8] sm:$0xf]
        %v333 = vld [vmem:[%s1 + $0x1ec] sm:$0xf]
        %v334 = vld [vmem:[%s1 + $0x1f0] sm:$0xf]
        %v335 = vld [vmem:[%s1 + $0x1f4] sm:$0xf]
        %v336 = vld [vmem:[%s1 + $0x1f8] sm:$0xf]
        %v337 = vld [vmem:[%s1 + $0x1fc] sm:$0xf]
        %v338 = vld [vmem:[%s1 + $0x200] sm:$0xf]
        %v339 = vld [vmem:[%s1 + $0x204] sm:$0xf]
        %v340 = vld [vmem:[%s1 + $0x208] sm:$0xf]
        %v341 = vld [vmem:[%s1 + $0x20c] sm:$0xf]
        %v342 = vld [vmem:[%s1 + $0x210] sm:$0xf]
        %v343 = vld [vmem:[%s1 + $0x214] sm:$0xf]
        %v344 = vld [vmem:[%s1 + $0x218] sm:$0xf]
        %v345 = vld [vmem:[%s1 + $0x21c] sm:$0xf]
        %v346 = vld [vmem:[%s1 + $0x220] sm:$0xf]
        %v347 = vld [vmem:[%s1 + $0x224] sm:$0xf]
        %v348 = vld [vmem:[%s1 + $0x228] sm:$0xf]
        %v349 = vld [vmem:[%s1 + $0x22c] sm:$0xf]
        %v350 = vld [vmem:[%s1 + $0x230] sm:$0xf]
        %v351 = vld [vmem:[%s1 + $0x234] sm:$0xf]
        %v352 = vld [vmem:[%s1 + $0x238] sm:$0xf]
        %v353 = vld [vmem:[%s1 + $0x23c] sm:$0xf]
        %v354 = vld [vmem:[%s2] sm:$0x1]
        %v392 = vunpack.c.l.b16 %v169
        %v393 = vunpack.c.l.b16 %v170
        %v394 = vunpack.c.l.b16 %v171
        %v395 = vunpack.c.l.b16 %v172
        %v396 = vunpack.c.l.b16 %v173
        %v397 = vunpack.c.l.b16 %v174
        %v398 = vunpack.c.l.b16 %v175
        %v399 = vunpack.c.l.b16 %v176
        %v400 = vunpack.c.l.b16 %v177
        %v401 = vunpack.c.l.b16 %v178
        %v402 = vunpack.c.l.b16 %v179
        %v403 = vunpack.c.l.b16 %v180
        %v404 = vunpack.c.l.b16 %v181
        %v405 = vunpack.c.l.b16 %v182
        %v406 = vunpack.c.l.b16 %v183
        %v407 = vunpack.c.l.b16 %v184
        %v408 = vunpack.c.l.b16 %v185
        %v409 = vunpack.c.l.b16 %v186
        %v410 = vunpack.c.l.b16 %v187
        %v411 = vunpack.c.l.b16 %v188
        %v412 = vunpack.c.l.b16 %v189
        %v413 = vunpack.c.l.b16 %v190
        %v414 = vunpack.c.l.b16 %v191
        %v415 = vunpack.c.l.b16 %v192
        %v416 = vunpack.c.l.b16 %v193
        %v417 = vunpack.c.l.b16 %v194
        %v418 = vunpack.c.l.b16 %v195
        %v419 = vunpack.c.l.b16 %v196
        %v420 = vunpack.c.l.b16 %v197
        %v421 = vunpack.c.l.b16 %v198
        %v422 = vunpack.c.l.b16 %v199
        %v423 = vunpack.c.l.b16 %v200
        %v424 = vunpack.c.l.b16 %v201
        %v425 = vunpack.c.l.b16 %v202
        %v426 = vunpack.c.l.b16 %v203
        %v427 = vunpack.c.l.b16 %v204
        %v428 = vunpack.c.l.b16 %v205
        %v429 = vpack.c.b16 %v393, %v392
        %v430 = vpack.c.b16 %v395, %v394
        %v431 = vpack.c.b16 %v397, %v396
        %v432 = vpack.c.b16 %v399, %v398
        %v433 = vpack.c.b16 %v401, %v400
        %v434 = vpack.c.b16 %v403, %v402
        %v435 = vpack.c.b16 %v405, %v404
        %v436 = vpack.c.b16 %v407, %v406
        %v437 = vpack.c.b16 %v409, %v408
        %v438 = vpack.c.b16 %v411, %v410
        %v439 = vpack.c.b16 %v413, %v412
        %v440 = vpack.c.b16 %v415, %v414
        %v441 = vpack.c.b16 %v417, %v416
        %v442 = vpack.c.b16 %v419, %v418
        %v443 = vpack.c.b16 %v421, %v420
        %v444 = vpack.c.b16 %v423, %v422
        %v445 = vpack.c.b16 %v425, %v424
        %v446 = vpack.c.b16 %v427, %v426
        %v447 = vpack.c.b16 %v428, %v428
        %vm448 = vsmask.f32 7424
        %v450 = vshrl.u32 %v429, 16
        %v452 = vshll.u32 %v429, 16
        %v454 = vrot.slane %v452, 1
        %v455 = vor.u32 %v450, %v454
        %v457 = vshll.u32 %v430, 16
        %v459 = vrot.slane %v457, 1
        %v460 = vsel %vm448, %v455, %v459
        %v461 = vshrl.u32 %v430, 16
        %v463 = vor.u32 %v461, %v459
        %v465 = vshll.u32 %v431, 16
        %v467 = vrot.slane %v465, 1
        %v468 = vsel %vm448, %v463, %v467
        %v469 = vshrl.u32 %v431, 16
        %v471 = vor.u32 %v469, %v467
        %v473 = vshll.u32 %v432, 16
        %v475 = vrot.slane %v473, 1
        %v476 = vsel %vm448, %v471, %v475
        %v477 = vshrl.u32 %v432, 16
        %v479 = vor.u32 %v477, %v475
        %v481 = vshll.u32 %v433, 16
        %v483 = vrot.slane %v481, 1
        %v484 = vsel %vm448, %v479, %v483
        %v485 = vshrl.u32 %v433, 16
        %v487 = vor.u32 %v485, %v483
        %v489 = vshll.u32 %v434, 16
        %v491 = vrot.slane %v489, 1
        %v492 = vsel %vm448, %v487, %v491
        %v493 = vshrl.u32 %v434, 16
        %v495 = vor.u32 %v493, %v491
        %v497 = vshll.u32 %v435, 16
        %v499 = vrot.slane %v497, 1
        %v500 = vsel %vm448, %v495, %v499
        %v501 = vshrl.u32 %v435, 16
        %v503 = vor.u32 %v501, %v499
        %v505 = vshll.u32 %v436, 16
        %v507 = vrot.slane %v505, 1
        %v508 = vsel %vm448, %v503, %v507
        %v509 = vshrl.u32 %v436, 16
        %v511 = vor.u32 %v509, %v507
        %v513 = vshll.u32 %v437, 16
        %v515 = vrot.slane %v513, 1
        %v516 = vsel %vm448, %v511, %v515
        %v517 = vshrl.u32 %v437, 16
        %v519 = vor.u32 %v517, %v515
        %v521 = vshll.u32 %v438, 16
        %v523 = vrot.slane %v521, 1
        %v524 = vsel %vm448, %v519, %v523
        %v525 = vshrl.u32 %v438, 16
        %v527 = vor.u32 %v525, %v523
        %v529 = vshll.u32 %v439, 16
        %v531 = vrot.slane %v529, 1
        %v532 = vsel %vm448, %v527, %v531
        %v533 = vshrl.u32 %v439, 16
        %v535 = vor.u32 %v533, %v531
        %v537 = vshll.u32 %v440, 16
        %v539 = vrot.slane %v537, 1
        %v540 = vsel %vm448, %v535, %v539
        %v541 = vshrl.u32 %v440, 16
        %v543 = vor.u32 %v541, %v539
        %v545 = vshll.u32 %v441, 16
        %v547 = vrot.slane %v545, 1
        %v548 = vsel %vm448, %v543, %v547
        %v549 = vshrl.u32 %v441, 16
        %v551 = vor.u32 %v549, %v547
        %v553 = vshll.u32 %v442, 16
        %v555 = vrot.slane %v553, 1
        %v556 = vsel %vm448, %v551, %v555
        %v557 = vshrl.u32 %v442, 16
        %v559 = vor.u32 %v557, %v555
        %v561 = vshll.u32 %v443, 16
        %v563 = vrot.slane %v561, 1
        %v564 = vsel %vm448, %v559, %v563
        %v565 = vshrl.u32 %v443, 16
        %v567 = vor.u32 %v565, %v563
        %v569 = vshll.u32 %v444, 16
        %v571 = vrot.slane %v569, 1
        %v572 = vsel %vm448, %v567, %v571
        %v573 = vshrl.u32 %v444, 16
        %v575 = vor.u32 %v573, %v571
        %v577 = vshll.u32 %v445, 16
        %v579 = vrot.slane %v577, 1
        %v580 = vsel %vm448, %v575, %v579
        %v581 = vshrl.u32 %v445, 16
        %v583 = vor.u32 %v581, %v579
        %v585 = vshll.u32 %v446, 16
        %v587 = vrot.slane %v585, 1
        %v588 = vsel %vm448, %v583, %v587
        %v589 = vshrl.u32 %v446, 16
        %v591 = vor.u32 %v589, %v587
        %v593 = vshll.u32 %v447, 16
        %v595 = vrot.slane %v593, 1
        %v596 = vsel %vm448, %v591, %v595
        %v631 = vunpack.c.l.b16 %v226
        %v632 = vunpack.c.l.b16 %v227
        %v633 = vunpack.c.l.b16 %v228
        %v634 = vunpack.c.l.b16 %v229
        %v635 = vunpack.c.l.b16 %v230
        %v636 = vunpack.c.l.b16 %v231
        %v637 = vunpack.c.l.b16 %v232
        %v638 = vunpack.c.l.b16 %v233
        %v639 = vunpack.c.l.b16 %v234
        %v640 = vunpack.c.l.b16 %v235
        %v641 = vunpack.c.l.b16 %v236
        %v642 = vunpack.c.l.b16 %v237
        %v643 = vunpack.c.l.b16 %v238
        %v644 = vunpack.c.l.b16 %v239
        %v645 = vunpack.c.l.b16 %v240
        %v646 = vunpack.c.l.b16 %v241
        %v647 = vpack.c.b16 %v632, %v631
        %v648 = vpack.c.b16 %v634, %v633
        %v649 = vpack.c.b16 %v636, %v635
        %v650 = vpack.c.b16 %v638, %v637
        %v651 = vpack.c.b16 %v640, %v639
        %v652 = vpack.c.b16 %v642, %v641
        %v653 = vpack.c.b16 %v644, %v643
        %v654 = vpack.c.b16 %v646, %v645
        %663 = vmatpush.bf16.msra.mxu0 %v654
        %664 = vmatpush.bf16.msra.mxu0 %v653
        %665 = vmatpush.bf16.msra.mxu0 %v652
        %666 = vmatpush.bf16.msra.mxu0 %v651
        %667 = vmatpush.bf16.msra.mxu0 %v650
        %668 = vmatpush.bf16.msra.mxu0 %v649
        %669 = vmatpush.bf16.msra.mxu0 %v648
        %670 = vmatpush.bf16.msra.mxu0 %v647
        %671 = vmatmul.bf16.gmra.mxu0 %v460
        %v672 = vpop.f32.mrf.mxu0
        %v673 = vadd.f32 0.0, %v672
        %v674 = vpop.f32.mrf.mxu0
        %v675 = vadd.f32 0.0, %v674
        %676 = vmatmul.bf16.gmra.mxu0 %v468
        %v677 = vpop.f32.mrf.mxu0
        %v678 = vadd.f32 0.0, %v677
        %v679 = vpop.f32.mrf.mxu0
        %v680 = vadd.f32 0.0, %v679
        %681 = vmatmul.bf16.gmra.mxu0 %v476
        %v682 = vpop.f32.mrf.mxu0
        %v683 = vadd.f32 0.0, %v682
        %v684 = vpop.f32.mrf.mxu0
        %v685 = vadd.f32 0.0, %v684
        %686 = vmatmul.bf16.gmra.mxu0 %v484
        %v687 = vpop.f32.mrf.mxu0
        %v688 = vadd.f32 0.0, %v687
        %v689 = vpop.f32.mrf.mxu0
        %v690 = vadd.f32 0.0, %v689
        %691 = vmatmul.bf16.gmra.mxu0 %v492
        %v692 = vpop.f32.mrf.mxu0
        %v693 = vadd.f32 0.0, %v692
        %v694 = vpop.f32.mrf.mxu0
        %v695 = vadd.f32 0.0, %v694
        %696 = vmatmul.bf16.gmra.mxu0 %v500
        %v697 = vpop.f32.mrf.mxu0
        %v698 = vadd.f32 0.0, %v697
        %v699 = vpop.f32.mrf.mxu0
        %v700 = vadd.f32 0.0, %v699
        %701 = vmatmul.bf16.gmra.mxu0 %v508
        %v702 = vpop.f32.mrf.mxu0
        %v703 = vadd.f32 0.0, %v702
        %v704 = vpop.f32.mrf.mxu0
        %v705 = vadd.f32 0.0, %v704
        %706 = vmatmul.bf16.gmra.mxu0 %v516
        %v707 = vpop.f32.mrf.mxu0
        %v708 = vadd.f32 0.0, %v707
        %v709 = vpop.f32.mrf.mxu0
        %v710 = vadd.f32 0.0, %v709
        %711 = vmatmul.bf16.gmra.mxu0 %v524
        %v712 = vpop.f32.mrf.mxu0
        %v713 = vadd.f32 0.0, %v712
        %v714 = vpop.f32.mrf.mxu0
        %v715 = vadd.f32 0.0, %v714
        %716 = vmatmul.bf16.gmra.mxu0 %v532
        %v717 = vpop.f32.mrf.mxu0
        %v718 = vadd.f32 0.0, %v717
        %v719 = vpop.f32.mrf.mxu0
        %v720 = vadd.f32 0.0, %v719
        %721 = vmatmul.bf16.gmra.mxu0 %v540
        %v722 = vpop.f32.mrf.mxu0
        %v723 = vadd.f32 0.0, %v722
        %v724 = vpop.f32.mrf.mxu0
        %v725 = vadd.f32 0.0, %v724
        %726 = vmatmul.bf16.gmra.mxu0 %v548
        %v727 = vpop.f32.mrf.mxu0
        %v728 = vadd.f32 0.0, %v727
        %v729 = vpop.f32.mrf.mxu0
        %v730 = vadd.f32 0.0, %v729
        %731 = vmatmul.bf16.gmra.mxu0 %v556
        %v732 = vpop.f32.mrf.mxu0
        %v733 = vadd.f32 0.0, %v732
        %v734 = vpop.f32.mrf.mxu0
        %v735 = vadd.f32 0.0, %v734
        %736 = vmatmul.bf16.gmra.mxu0 %v564
        %v737 = vpop.f32.mrf.mxu0
        %v738 = vadd.f32 0.0, %v737
        %v739 = vpop.f32.mrf.mxu0
        %v740 = vadd.f32 0.0, %v739
        %741 = vmatmul.bf16.gmra.mxu0 %v572
        %v742 = vpop.f32.mrf.mxu0
        %v743 = vadd.f32 0.0, %v742
        %v744 = vpop.f32.mrf.mxu0
        %v745 = vadd.f32 0.0, %v744
        %746 = vmatmul.bf16.gmra.mxu0 %v580
        %v747 = vpop.f32.mrf.mxu0
        %v748 = vadd.f32 0.0, %v747
        %v749 = vpop.f32.mrf.mxu0
        %v750 = vadd.f32 0.0, %v749
        %751 = vmatmul.bf16.gmra.mxu0 %v588
        %v752 = vpop.f32.mrf.mxu0
        %v753 = vadd.f32 0.0, %v752
        %v754 = vpop.f32.mrf.mxu0
        %v755 = vadd.f32 0.0, %v754
        %756 = vmatmul.bf16.gmra.mxu0 %v596
        %v757 = vpop.f32.mrf.mxu0
        %v758 = vadd.f32 0.0, %v757
        %v759 = vpop.f32.mrf.mxu0
        %v760 = vadd.f32 0.0, %v759
        %761 = vdwg.mxu0
        %v796 = vunpack.c.l.b16 %v210
        %v797 = vunpack.c.l.b16 %v211
        %v798 = vunpack.c.l.b16 %v212
        %v799 = vunpack.c.l.b16 %v213
        %v800 = vunpack.c.l.b16 %v214
        %v801 = vunpack.c.l.b16 %v215
        %v802 = vunpack.c.l.b16 %v216
        %v803 = vunpack.c.l.b16 %v217
        %v804 = vunpack.c.l.b16 %v218
        %v805 = vunpack.c.l.b16 %v219
        %v806 = vunpack.c.l.b16 %v220
        %v807 = vunpack.c.l.b16 %v221
        %v808 = vunpack.c.l.b16 %v222
        %v809 = vunpack.c.l.b16 %v223
        %v810 = vunpack.c.l.b16 %v224
        %v811 = vunpack.c.l.b16 %v225
        %v812 = vpack.c.b16 %v797, %v796
        %v813 = vpack.c.b16 %v799, %v798
        %v814 = vpack.c.b16 %v801, %v800
        %v815 = vpack.c.b16 %v803, %v802
        %v816 = vpack.c.b16 %v805, %v804
        %v817 = vpack.c.b16 %v807, %v806
        %v818 = vpack.c.b16 %v809, %v808
        %v819 = vpack.c.b16 %v811, %v810
        %828 = vmatpush.bf16.msra.mxu0 %v819
        %829 = vmatpush.bf16.msra.mxu0 %v818
        %830 = vmatpush.bf16.msra.mxu0 %v817
        %831 = vmatpush.bf16.msra.mxu0 %v816
        %832 = vmatpush.bf16.msra.mxu0 %v815
        %833 = vmatpush.bf16.msra.mxu0 %v814
        %834 = vmatpush.bf16.msra.mxu0 %v813
        %835 = vmatpush.bf16.msra.mxu0 %v812
        %836 = vmatmul.bf16.gmra.mxu0 %v429
        %v837 = vpop.f32.mrf.mxu0
        %v838 = vadd.f32 %v673, %v837
        %v839 = vpop.f32.mrf.mxu0
        %v840 = vadd.f32 %v675, %v839
        %841 = vmatmul.bf16.gmra.mxu0 %v430
        %v842 = vpop.f32.mrf.mxu0
        %v843 = vadd.f32 %v678, %v842
        %v844 = vpop.f32.mrf.mxu0
        %v845 = vadd.f32 %v680, %v844
        %846 = vmatmul.bf16.gmra.mxu0 %v431
        %v847 = vpop.f32.mrf.mxu0
        %v848 = vadd.f32 %v683, %v847
        %v849 = vpop.f32.mrf.mxu0
        %v850 = vadd.f32 %v685, %v849
        %851 = vmatmul.bf16.gmra.mxu0 %v432
        %v852 = vpop.f32.mrf.mxu0
        %v853 = vadd.f32 %v688, %v852
        %v854 = vpop.f32.mrf.mxu0
        %v855 = vadd.f32 %v690, %v854
        %856 = vmatmul.bf16.gmra.mxu0 %v433
        %v857 = vpop.f32.mrf.mxu0
        %v858 = vadd.f32 %v693, %v857
        %v859 = vpop.f32.mrf.mxu0
        %v860 = vadd.f32 %v695, %v859
        %861 = vmatmul.bf16.gmra.mxu0 %v434
        %v862 = vpop.f32.mrf.mxu0
        %v863 = vadd.f32 %v698, %v862
        %v864 = vpop.f32.mrf.mxu0
        %v865 = vadd.f32 %v700, %v864
        %866 = vmatmul.bf16.gmra.mxu0 %v435
        %v867 = vpop.f32.mrf.mxu0
        %v868 = vadd.f32 %v703, %v867
        %v869 = vpop.f32.mrf.mxu0
        %v870 = vadd.f32 %v705, %v869
        %871 = vmatmul.bf16.gmra.mxu0 %v436
        %v872 = vpop.f32.mrf.mxu0
        %v873 = vadd.f32 %v708, %v872
        %v874 = vpop.f32.mrf.mxu0
        %v875 = vadd.f32 %v710, %v874
        %876 = vmatmul.bf16.gmra.mxu0 %v437
        %v877 = vpop.f32.mrf.mxu0
        %v878 = vadd.f32 %v713, %v877
        %v879 = vpop.f32.mrf.mxu0
        %v880 = vadd.f32 %v715, %v879
        %881 = vmatmul.bf16.gmra.mxu0 %v438
        %v882 = vpop.f32.mrf.mxu0
        %v883 = vadd.f32 %v718, %v882
        %v884 = vpop.f32.mrf.mxu0
        %v885 = vadd.f32 %v720, %v884
        %886 = vmatmul.bf16.gmra.mxu0 %v439
        %v887 = vpop.f32.mrf.mxu0
        %v888 = vadd.f32 %v723, %v887
        %v889 = vpop.f32.mrf.mxu0
        %v890 = vadd.f32 %v725, %v889
        %891 = vmatmul.bf16.gmra.mxu0 %v440
        %v892 = vpop.f32.mrf.mxu0
        %v893 = vadd.f32 %v728, %v892
        %v894 = vpop.f32.mrf.mxu0
        %v895 = vadd.f32 %v730, %v894
        %896 = vmatmul.bf16.gmra.mxu0 %v441
        %v897 = vpop.f32.mrf.mxu0
        %v898 = vadd.f32 %v733, %v897
        %v899 = vpop.f32.mrf.mxu0
        %v900 = vadd.f32 %v735, %v899
        %901 = vmatmul.bf16.gmra.mxu0 %v442
        %v902 = vpop.f32.mrf.mxu0
        %v903 = vadd.f32 %v738, %v902
        %v904 = vpop.f32.mrf.mxu0
        %v905 = vadd.f32 %v740, %v904
        %906 = vmatmul.bf16.gmra.mxu0 %v443
        %v907 = vpop.f32.mrf.mxu0
        %v908 = vadd.f32 %v743, %v907
        %v909 = vpop.f32.mrf.mxu0
        %v910 = vadd.f32 %v745, %v909
        %911 = vmatmul.bf16.gmra.mxu0 %v444
        %v912 = vpop.f32.mrf.mxu0
        %v913 = vadd.f32 %v748, %v912
        %v914 = vpop.f32.mrf.mxu0
        %v915 = vadd.f32 %v750, %v914
        %916 = vmatmul.bf16.gmra.mxu0 %v445
        %v917 = vpop.f32.mrf.mxu0
        %v918 = vadd.f32 %v753, %v917
        %v919 = vpop.f32.mrf.mxu0
        %v920 = vadd.f32 %v755, %v919
        %921 = vmatmul.bf16.gmra.mxu0 %v446
        %v922 = vpop.f32.mrf.mxu0
        %v923 = vadd.f32 %v758, %v922
        %v924 = vpop.f32.mrf.mxu0
        %v925 = vadd.f32 %v760, %v924
        %926 = vdwg.mxu0
        %vm927 = vcmask 1046528
        %v928 = vrot.slane %v429, 1
        %v929 = vrot.slane %v430, 1
        %v930 = vsel %vm927, %v928, %v929
        %v931 = vrot.slane %v431, 1
        %v932 = vsel %vm927, %v929, %v931
        %v933 = vrot.slane %v432, 1
        %v934 = vsel %vm927, %v931, %v933
        %v935 = vrot.slane %v433, 1
        %v936 = vsel %vm927, %v933, %v935
        %v937 = vrot.slane %v434, 1
        %v938 = vsel %vm927, %v935, %v937
        %v939 = vrot.slane %v435, 1
        %v940 = vsel %vm927, %v937, %v939
        %v941 = vrot.slane %v436, 1
        %v942 = vsel %vm927, %v939, %v941
        %v943 = vrot.slane %v437, 1
        %v944 = vsel %vm927, %v941, %v943
        %v945 = vrot.slane %v438, 1
        %v946 = vsel %vm927, %v943, %v945
        %v947 = vrot.slane %v439, 1
        %v948 = vsel %vm927, %v945, %v947
        %v949 = vrot.slane %v440, 1
        %v950 = vsel %vm927, %v947, %v949
        %v951 = vrot.slane %v441, 1
        %v952 = vsel %vm927, %v949, %v951
        %v953 = vrot.slane %v442, 1
        %v954 = vsel %vm927, %v951, %v953
        %v955 = vrot.slane %v443, 1
        %v956 = vsel %vm927, %v953, %v955
        %v957 = vrot.slane %v444, 1
        %v958 = vsel %vm927, %v955, %v957
        %v959 = vrot.slane %v445, 1
        %v960 = vsel %vm927, %v957, %v959
        %v961 = vrot.slane %v446, 1
        %v962 = vsel %vm927, %v959, %v961
        %v963 = vrot.slane %v447, 1
        %v964 = vsel %vm927, %v961, %v963
        %v999 = vunpack.c.l.b16 %v242
        %v1000 = vunpack.c.l.b16 %v243
        %v1001 = vunpack.c.l.b16 %v244
        %v1002 = vunpack.c.l.b16 %v245
        %v1003 = vunpack.c.l.b16 %v246
        %v1004 = vunpack.c.l.b16 %v247
        %v1005 = vunpack.c.l.b16 %v248
        %v1006 = vunpack.c.l.b16 %v249
        %v1007 = vunpack.c.l.b16 %v250
        %v1008 = vunpack.c.l.b16 %v251
        %v1009 = vunpack.c.l.b16 %v252
        %v1010 = vunpack.c.l.b16 %v253
        %v1011 = vunpack.c.l.b16 %v254
        %v1012 = vunpack.c.l.b16 %v255
        %v1013 = vunpack.c.l.b16 %v256
        %v1014 = vunpack.c.l.b16 %v257
        %v1015 = vpack.c.b16 %v1000, %v999
        %v1016 = vpack.c.b16 %v1002, %v1001
        %v1017 = vpack.c.b16 %v1004, %v1003
        %v1018 = vpack.c.b16 %v1006, %v1005
        %v1019 = vpack.c.b16 %v1008, %v1007
        %v1020 = vpack.c.b16 %v1010, %v1009
        %v1021 = vpack.c.b16 %v1012, %v1011
        %v1022 = vpack.c.b16 %v1014, %v1013
        %1031 = vmatpush.bf16.msra.mxu0 %v1022
        %1032 = vmatpush.bf16.msra.mxu0 %v1021
        %1033 = vmatpush.bf16.msra.mxu0 %v1020
        %1034 = vmatpush.bf16.msra.mxu0 %v1019
        %1035 = vmatpush.bf16.msra.mxu0 %v1018
        %1036 = vmatpush.bf16.msra.mxu0 %v1017
        %1037 = vmatpush.bf16.msra.mxu0 %v1016
        %1038 = vmatpush.bf16.msra.mxu0 %v1015
        %1039 = vmatmul.bf16.gmra.mxu0 %v930
        %v1040 = vpop.f32.mrf.mxu0
        %v1041 = vadd.f32 0.0, %v1040
        %v1042 = vpop.f32.mrf.mxu0
        %v1043 = vadd.f32 0.0, %v1042
        %1044 = vmatmul.bf16.gmra.mxu0 %v932
        %v1045 = vpop.f32.mrf.mxu0
        %v1046 = vadd.f32 0.0, %v1045
        %v1047 = vpop.f32.mrf.mxu0
        %v1048 = vadd.f32 0.0, %v1047
        %1049 = vmatmul.bf16.gmra.mxu0 %v934
        %v1050 = vpop.f32.mrf.mxu0
        %v1051 = vadd.f32 0.0, %v1050
        %v1052 = vpop.f32.mrf.mxu0
        %v1053 = vadd.f32 0.0, %v1052
        %1054 = vmatmul.bf16.gmra.mxu0 %v936
        %v1055 = vpop.f32.mrf.mxu0
        %v1056 = vadd.f32 0.0, %v1055
        %v1057 = vpop.f32.mrf.mxu0
        %v1058 = vadd.f32 0.0, %v1057
        %1059 = vmatmul.bf16.gmra.mxu0 %v938
        %v1060 = vpop.f32.mrf.mxu0
        %v1061 = vadd.f32 0.0, %v1060
        %v1062 = vpop.f32.mrf.mxu0
        %v1063 = vadd.f32 0.0, %v1062
        %1064 = vmatmul.bf16.gmra.mxu0 %v940
        %v1065 = vpop.f32.mrf.mxu0
        %v1066 = vadd.f32 0.0, %v1065
        %v1067 = vpop.f32.mrf.mxu0
        %v1068 = vadd.f32 0.0, %v1067
        %1069 = vmatmul.bf16.gmra.mxu0 %v942
        %v1070 = vpop.f32.mrf.mxu0
        %v1071 = vadd.f32 0.0, %v1070
        %v1072 = vpop.f32.mrf.mxu0
        %v1073 = vadd.f32 0.0, %v1072
        %1074 = vmatmul.bf16.gmra.mxu0 %v944
        %v1075 = vpop.f32.mrf.mxu0
        %v1076 = vadd.f32 0.0, %v1075
        %v1077 = vpop.f32.mrf.mxu0
        %v1078 = vadd.f32 0.0, %v1077
        %1079 = vmatmul.bf16.gmra.mxu0 %v946
        %v1080 = vpop.f32.mrf.mxu0
        %v1081 = vadd.f32 0.0, %v1080
        %v1082 = vpop.f32.mrf.mxu0
        %v1083 = vadd.f32 0.0, %v1082
        %1084 = vmatmul.bf16.gmra.mxu0 %v948
        %v1085 = vpop.f32.mrf.mxu0
        %v1086 = vadd.f32 0.0, %v1085
        %v1087 = vpop.f32.mrf.mxu0
        %v1088 = vadd.f32 0.0, %v1087
        %1089 = vmatmul.bf16.gmra.mxu0 %v950
        %v1090 = vpop.f32.mrf.mxu0
        %v1091 = vadd.f32 0.0, %v1090
        %v1092 = vpop.f32.mrf.mxu0
        %v1093 = vadd.f32 0.0, %v1092
        %1094 = vmatmul.bf16.gmra.mxu0 %v952
        %v1095 = vpop.f32.mrf.mxu0
        %v1096 = vadd.f32 0.0, %v1095
        %v1097 = vpop.f32.mrf.mxu0
        %v1098 = vadd.f32 0.0, %v1097
        %1099 = vmatmul.bf16.gmra.mxu0 %v954
        %v1100 = vpop.f32.mrf.mxu0
        %v1101 = vadd.f32 0.0, %v1100
        %v1102 = vpop.f32.mrf.mxu0
        %v1103 = vadd.f32 0.0, %v1102
        %1104 = vmatmul.bf16.gmra.mxu0 %v956
        %v1105 = vpop.f32.mrf.mxu0
        %v1106 = vadd.f32 0.0, %v1105
        %v1107 = vpop.f32.mrf.mxu0
        %v1108 = vadd.f32 0.0, %v1107
        %1109 = vmatmul.bf16.gmra.mxu0 %v958
        %v1110 = vpop.f32.mrf.mxu0
        %v1111 = vadd.f32 0.0, %v1110
        %v1112 = vpop.f32.mrf.mxu0
        %v1113 = vadd.f32 0.0, %v1112
        %1114 = vmatmul.bf16.gmra.mxu0 %v960
        %v1115 = vpop.f32.mrf.mxu0
        %v1116 = vadd.f32 0.0, %v1115
        %v1117 = vpop.f32.mrf.mxu0
        %v1118 = vadd.f32 0.0, %v1117
        %1119 = vmatmul.bf16.gmra.mxu0 %v962
        %v1120 = vpop.f32.mrf.mxu0
        %v1121 = vadd.f32 0.0, %v1120
        %v1122 = vpop.f32.mrf.mxu0
        %v1123 = vadd.f32 0.0, %v1122
        %1124 = vmatmul.bf16.gmra.mxu0 %v964
        %v1125 = vpop.f32.mrf.mxu0
        %v1126 = vadd.f32 0.0, %v1125
        %v1127 = vpop.f32.mrf.mxu0
        %v1128 = vadd.f32 0.0, %v1127
        %1129 = vdwg.mxu0
        %v1130 = vadd.f32 %v838, %v1041
        %v1131 = vadd.f32 %v840, %v1043
        %v1132 = vadd.f32 %v843, %v1046
        %v1133 = vadd.f32 %v845, %v1048
        %v1134 = vadd.f32 %v848, %v1051
        %v1135 = vadd.f32 %v850, %v1053
        %v1136 = vadd.f32 %v853, %v1056
        %v1137 = vadd.f32 %v855, %v1058
        %v1138 = vadd.f32 %v858, %v1061
        %v1139 = vadd.f32 %v860, %v1063
        %v1140 = vadd.f32 %v863, %v1066
        %v1141 = vadd.f32 %v865, %v1068
        %v1142 = vadd.f32 %v868, %v1071
        %v1143 = vadd.f32 %v870, %v1073
        %v1144 = vadd.f32 %v873, %v1076
        %v1145 = vadd.f32 %v875, %v1078
        %v1146 = vadd.f32 %v878, %v1081
        %v1147 = vadd.f32 %v880, %v1083
        %v1148 = vadd.f32 %v883, %v1086
        %v1149 = vadd.f32 %v885, %v1088
        %v1150 = vadd.f32 %v888, %v1091
        %v1151 = vadd.f32 %v890, %v1093
        %v1152 = vadd.f32 %v893, %v1096
        %v1153 = vadd.f32 %v895, %v1098
        %v1154 = vadd.f32 %v898, %v1101
        %v1155 = vadd.f32 %v900, %v1103
        %v1156 = vadd.f32 %v903, %v1106
        %v1157 = vadd.f32 %v905, %v1108
        %v1158 = vadd.f32 %v908, %v1111
        %v1159 = vadd.f32 %v910, %v1113
        %v1160 = vadd.f32 %v913, %v1116
        %v1161 = vadd.f32 %v915, %v1118
        %v1162 = vadd.f32 %v918, %v1121
        %v1163 = vadd.f32 %v920, %v1123
        %v1164 = vadd.f32 %v923, %v1126
        %v1165 = vadd.f32 %v925, %v1128
        %v1168 = vunpack.c.l.b16 %v206
        %v1169 = vunpack.c.l.b16 %v207
        %v1170 = vpack.c.b16 %v1168, %v428
        %v1171 = vpack.c.b16 %v1169, %v1169
        %v1172 = vrot.slane %v1170, 1
        %v1173 = vsel %vm927, %v961, %v1172
        %v1174 = vrot.slane %v1171, 1
        %v1175 = vsel %vm927, %v1172, %v1174
        %v1194 = vunpack.c.l.b16 %v258
        %v1195 = vunpack.c.l.b16 %v259
        %v1196 = vunpack.c.l.b16 %v260
        %v1197 = vunpack.c.l.b16 %v261
        %v1198 = vunpack.c.l.b16 %v262
        %v1199 = vunpack.c.l.b16 %v263
        %v1200 = vunpack.c.l.b16 %v264
        %v1201 = vunpack.c.l.b16 %v265
        %v1202 = vunpack.c.l.b16 %v266
        %v1203 = vunpack.c.l.b16 %v267
        %v1204 = vunpack.c.l.b16 %v268
        %v1205 = vunpack.c.l.b16 %v269
        %v1206 = vunpack.c.l.b16 %v270
        %v1207 = vunpack.c.l.b16 %v271
        %v1208 = vunpack.c.l.b16 %v272
        %v1209 = vunpack.c.l.b16 %v273
        %v1210 = vpack.c.b16 %v1195, %v1194
        %v1211 = vpack.c.b16 %v1197, %v1196
        %v1212 = vpack.c.b16 %v1199, %v1198
        %v1213 = vpack.c.b16 %v1201, %v1200
        %v1214 = vpack.c.b16 %v1203, %v1202
        %v1215 = vpack.c.b16 %v1205, %v1204
        %v1216 = vpack.c.b16 %v1207, %v1206
        %v1217 = vpack.c.b16 %v1209, %v1208
        %1226 = vmatpush.bf16.msra.mxu0 %v1217
        %1227 = vmatpush.bf16.msra.mxu0 %v1216
        %1228 = vmatpush.bf16.msra.mxu0 %v1215
        %1229 = vmatpush.bf16.msra.mxu0 %v1214
        %1230 = vmatpush.bf16.msra.mxu0 %v1213
        %1231 = vmatpush.bf16.msra.mxu0 %v1212
        %1232 = vmatpush.bf16.msra.mxu0 %v1211
        %1233 = vmatpush.bf16.msra.mxu0 %v1210
        %1234 = vmatmul.bf16.gmra.mxu0 %v932
        %v1235 = vpop.f32.mrf.mxu0
        %v1236 = vadd.f32 0.0, %v1235
        %v1237 = vpop.f32.mrf.mxu0
        %v1238 = vadd.f32 0.0, %v1237
        %1239 = vmatmul.bf16.gmra.mxu0 %v934
        %v1240 = vpop.f32.mrf.mxu0
        %v1241 = vadd.f32 0.0, %v1240
        %v1242 = vpop.f32.mrf.mxu0
        %v1243 = vadd.f32 0.0, %v1242
        %1244 = vmatmul.bf16.gmra.mxu0 %v936
        %v1245 = vpop.f32.mrf.mxu0
        %v1246 = vadd.f32 0.0, %v1245
        %v1247 = vpop.f32.mrf.mxu0
        %v1248 = vadd.f32 0.0, %v1247
        %1249 = vmatmul.bf16.gmra.mxu0 %v938
        %v1250 = vpop.f32.mrf.mxu0
        %v1251 = vadd.f32 0.0, %v1250
        %v1252 = vpop.f32.mrf.mxu0
        %v1253 = vadd.f32 0.0, %v1252
        %1254 = vmatmul.bf16.gmra.mxu0 %v940
        %v1255 = vpop.f32.mrf.mxu0
        %v1256 = vadd.f32 0.0, %v1255
        %v1257 = vpop.f32.mrf.mxu0
        %v1258 = vadd.f32 0.0, %v1257
        %1259 = vmatmul.bf16.gmra.mxu0 %v942
        %v1260 = vpop.f32.mrf.mxu0
        %v1261 = vadd.f32 0.0, %v1260
        %v1262 = vpop.f32.mrf.mxu0
        %v1263 = vadd.f32 0.0, %v1262
        %1264 = vmatmul.bf16.gmra.mxu0 %v944
        %v1265 = vpop.f32.mrf.mxu0
        %v1266 = vadd.f32 0.0, %v1265
        %v1267 = vpop.f32.mrf.mxu0
        %v1268 = vadd.f32 0.0, %v1267
        %1269 = vmatmul.bf16.gmra.mxu0 %v946
        %v1270 = vpop.f32.mrf.mxu0
        %v1271 = vadd.f32 0.0, %v1270
        %v1272 = vpop.f32.mrf.mxu0
        %v1273 = vadd.f32 0.0, %v1272
        %1274 = vmatmul.bf16.gmra.mxu0 %v948
        %v1275 = vpop.f32.mrf.mxu0
        %v1276 = vadd.f32 0.0, %v1275
        %v1277 = vpop.f32.mrf.mxu0
        %v1278 = vadd.f32 0.0, %v1277
        %1279 = vmatmul.bf16.gmra.mxu0 %v950
        %v1280 = vpop.f32.mrf.mxu0
        %v1281 = vadd.f32 0.0, %v1280
        %v1282 = vpop.f32.mrf.mxu0
        %v1283 = vadd.f32 0.0, %v1282
        %1284 = vmatmul.bf16.gmra.mxu0 %v952
        %v1285 = vpop.f32.mrf.mxu0
        %v1286 = vadd.f32 0.0, %v1285
        %v1287 = vpop.f32.mrf.mxu0
        %v1288 = vadd.f32 0.0, %v1287
        %1289 = vmatmul.bf16.gmra.mxu0 %v954
        %v1290 = vpop.f32.mrf.mxu0
        %v1291 = vadd.f32 0.0, %v1290
        %v1292 = vpop.f32.mrf.mxu0
        %v1293 = vadd.f32 0.0, %v1292
        %1294 = vmatmul.bf16.gmra.mxu0 %v956
        %v1295 = vpop.f32.mrf.mxu0
        %v1296 = vadd.f32 0.0, %v1295
        %v1297 = vpop.f32.mrf.mxu0
        %v1298 = vadd.f32 0.0, %v1297
        %1299 = vmatmul.bf16.gmra.mxu0 %v958
        %v1300 = vpop.f32.mrf.mxu0
        %v1301 = vadd.f32 0.0, %v1300
        %v1302 = vpop.f32.mrf.mxu0
        %v1303 = vadd.f32 0.0, %v1302
        %1304 = vmatmul.bf16.gmra.mxu0 %v960
        %v1305 = vpop.f32.mrf.mxu0
        %v1306 = vadd.f32 0.0, %v1305
        %v1307 = vpop.f32.mrf.mxu0
        %v1308 = vadd.f32 0.0, %v1307
        %1309 = vmatmul.bf16.gmra.mxu0 %v962
        %v1310 = vpop.f32.mrf.mxu0
        %v1311 = vadd.f32 0.0, %v1310
        %v1312 = vpop.f32.mrf.mxu0
        %v1313 = vadd.f32 0.0, %v1312
        %1314 = vmatmul.bf16.gmra.mxu0 %v1173
        %v1315 = vpop.f32.mrf.mxu0
        %v1316 = vadd.f32 0.0, %v1315
        %v1317 = vpop.f32.mrf.mxu0
        %v1318 = vadd.f32 0.0, %v1317
        %1319 = vmatmul.bf16.gmra.mxu0 %v1175
        %v1320 = vpop.f32.mrf.mxu0
        %v1321 = vadd.f32 0.0, %v1320
        %v1322 = vpop.f32.mrf.mxu0
        %v1323 = vadd.f32 0.0, %v1322
        %1324 = vdwg.mxu0
        %v1325 = vadd.f32 %v1130, %v1236
        %v1326 = vadd.f32 %v1131, %v1238
        %v1327 = vadd.f32 %v1132, %v1241
        %v1328 = vadd.f32 %v1133, %v1243
        %v1329 = vadd.f32 %v1134, %v1246
        %v1330 = vadd.f32 %v1135, %v1248
        %v1331 = vadd.f32 %v1136, %v1251
        %v1332 = vadd.f32 %v1137, %v1253
        %v1333 = vadd.f32 %v1138, %v1256
        %v1334 = vadd.f32 %v1139, %v1258
        %v1335 = vadd.f32 %v1140, %v1261
        %v1336 = vadd.f32 %v1141, %v1263
        %v1337 = vadd.f32 %v1142, %v1266
        %v1338 = vadd.f32 %v1143, %v1268
        %v1339 = vadd.f32 %v1144, %v1271
        %v1340 = vadd.f32 %v1145, %v1273
        %v1341 = vadd.f32 %v1146, %v1276
        %v1342 = vadd.f32 %v1147, %v1278
        %v1343 = vadd.f32 %v1148, %v1281
        %v1344 = vadd.f32 %v1149, %v1283
        %v1345 = vadd.f32 %v1150, %v1286
        %v1346 = vadd.f32 %v1151, %v1288
        %v1347 = vadd.f32 %v1152, %v1291
        %v1348 = vadd.f32 %v1153, %v1293
        %v1349 = vadd.f32 %v1154, %v1296
        %v1350 = vadd.f32 %v1155, %v1298
        %v1351 = vadd.f32 %v1156, %v1301
        %v1352 = vadd.f32 %v1157, %v1303
        %v1353 = vadd.f32 %v1158, %v1306
        %v1354 = vadd.f32 %v1159, %v1308
        %v1355 = vadd.f32 %v1160, %v1311
        %v1356 = vadd.f32 %v1161, %v1313
        %v1357 = vadd.f32 %v1162, %v1316
        %v1358 = vadd.f32 %v1163, %v1318
        %v1359 = vadd.f32 %v1164, %v1321
        %v1360 = vadd.f32 %v1165, %v1323
        %vm1361 = vsmask.f32 6400
        %v1362 = vrot.slane %v461, 1
        %v1363 = vrot.slane %v457, 2
        %v1364 = vor.u32 %v1362, %v1363
        %v1365 = vrot.slane %v469, 1
        %v1366 = vrot.slane %v465, 2
        %v1367 = vor.u32 %v1365, %v1366
        %v1368 = vsel %vm1361, %v1364, %v1367
        %v1369 = vrot.slane %v477, 1
        %v1370 = vrot.slane %v473, 2
        %v1371 = vor.u32 %v1369, %v1370
        %v1372 = vsel %vm1361, %v1367, %v1371
        %v1373 = vrot.slane %v485, 1
        %v1374 = vrot.slane %v481, 2
        %v1375 = vor.u32 %v1373, %v1374
        %v1376 = vsel %vm1361, %v1371, %v1375
        %v1377 = vrot.slane %v493, 1
        %v1378 = vrot.slane %v489, 2
        %v1379 = vor.u32 %v1377, %v1378
        %v1380 = vsel %vm1361, %v1375, %v1379
        %v1381 = vrot.slane %v501, 1
        %v1382 = vrot.slane %v497, 2
        %v1383 = vor.u32 %v1381, %v1382
        %v1384 = vsel %vm1361, %v1379, %v1383
        %v1385 = vrot.slane %v509, 1
        %v1386 = vrot.slane %v505, 2
        %v1387 = vor.u32 %v1385, %v1386
        %v1388 = vsel %vm1361, %v1383, %v1387
        %v1389 = vrot.slane %v517, 1
        %v1390 = vrot.slane %v513, 2
        %v1391 = vor.u32 %v1389, %v1390
        %v1392 = vsel %vm1361, %v1387, %v1391
        %v1393 = vrot.slane %v525, 1
        %v1394 = vrot.slane %v521, 2
        %v1395 = vor.u32 %v1393, %v1394
        %v1396 = vsel %vm1361, %v1391, %v1395
        %v1397 = vrot.slane %v533, 1
        %v1398 = vrot.slane %v529, 2
        %v1399 = vor.u32 %v1397, %v1398
        %v1400 = vsel %vm1361, %v1395, %v1399
        %v1401 = vrot.slane %v541, 1
        %v1402 = vrot.slane %v537, 2
        %v1403 = vor.u32 %v1401, %v1402
        %v1404 = vsel %vm1361, %v1399, %v1403
        %v1405 = vrot.slane %v549, 1
        %v1406 = vrot.slane %v545, 2
        %v1407 = vor.u32 %v1405, %v1406
        %v1408 = vsel %vm1361, %v1403, %v1407
        %v1409 = vrot.slane %v557, 1
        %v1410 = vrot.slane %v553, 2
        %v1411 = vor.u32 %v1409, %v1410
        %v1412 = vsel %vm1361, %v1407, %v1411
        %v1413 = vrot.slane %v565, 1
        %v1414 = vrot.slane %v561, 2
        %v1415 = vor.u32 %v1413, %v1414
        %v1416 = vsel %vm1361, %v1411, %v1415
        %v1417 = vrot.slane %v573, 1
        %v1418 = vrot.slane %v569, 2
        %v1419 = vor.u32 %v1417, %v1418
        %v1420 = vsel %vm1361, %v1415, %v1419
        %v1421 = vrot.slane %v581, 1
        %v1422 = vrot.slane %v577, 2
        %v1423 = vor.u32 %v1421, %v1422
        %v1424 = vsel %vm1361, %v1419, %v1423
        %v1425 = vrot.slane %v589, 1
        %v1426 = vrot.slane %v585, 2
        %v1427 = vor.u32 %v1425, %v1426
        %v1428 = vsel %vm1361, %v1423, %v1427
        %v1430 = vshrl.u32 %v1170, 16
        %v1432 = vrot.slane %v1430, 1
        %v1433 = vshll.u32 %v1170, 16
        %v1435 = vrot.slane %v1433, 2
        %v1436 = vor.u32 %v1432, %v1435
        %v1437 = vsel %vm1361, %v1427, %v1436
        %v1439 = vshrl.u32 %v1171, 16
        %v1441 = vrot.slane %v1439, 1
        %v1442 = vshll.u32 %v1171, 16
        %v1444 = vrot.slane %v1442, 2
        %v1445 = vor.u32 %v1441, %v1444
        %v1446 = vsel %vm1361, %v1436, %v1445
        %v1481 = vunpack.c.l.b16 %v274
        %v1482 = vunpack.c.l.b16 %v275
        %v1483 = vunpack.c.l.b16 %v276
        %v1484 = vunpack.c.l.b16 %v277
        %v1485 = vunpack.c.l.b16 %v278
        %v1486 = vunpack.c.l.b16 %v279
        %v1487 = vunpack.c.l.b16 %v280
        %v1488 = vunpack.c.l.b16 %v281
        %v1489 = vunpack.c.l.b16 %v282
        %v1490 = vunpack.c.l.b16 %v283
        %v1491 = vunpack.c.l.b16 %v284
        %v1492 = vunpack.c.l.b16 %v285
        %v1493 = vunpack.c.l.b16 %v286
        %v1494 = vunpack.c.l.b16 %v287
        %v1495 = vunpack.c.l.b16 %v288
        %v1496 = vunpack.c.l.b16 %v289
        %v1497 = vpack.c.b16 %v1482, %v1481
        %v1498 = vpack.c.b16 %v1484, %v1483
        %v1499 = vpack.c.b16 %v1486, %v1485
        %v1500 = vpack.c.b16 %v1488, %v1487
        %v1501 = vpack.c.b16 %v1490, %v1489
        %v1502 = vpack.c.b16 %v1492, %v1491
        %v1503 = vpack.c.b16 %v1494, %v1493
        %v1504 = vpack.c.b16 %v1496, %v1495
        %1513 = vmatpush.bf16.msra.mxu0 %v1504
        %1514 = vmatpush.bf16.msra.mxu0 %v1503
        %1515 = vmatpush.bf16.msra.mxu0 %v1502
        %1516 = vmatpush.bf16.msra.mxu0 %v1501
        %1517 = vmatpush.bf16.msra.mxu0 %v1500
        %1518 = vmatpush.bf16.msra.mxu0 %v1499
        %1519 = vmatpush.bf16.msra.mxu0 %v1498
        %1520 = vmatpush.bf16.msra.mxu0 %v1497
        %1521 = vmatmul.bf16.gmra.mxu0 %v1368
        %v1522 = vpop.f32.mrf.mxu0
        %v1523 = vadd.f32 0.0, %v1522
        %v1524 = vpop.f32.mrf.mxu0
        %v1525 = vadd.f32 0.0, %v1524
        %1526 = vmatmul.bf16.gmra.mxu0 %v1372
        %v1527 = vpop.f32.mrf.mxu0
        %v1528 = vadd.f32 0.0, %v1527
        %v1529 = vpop.f32.mrf.mxu0
        %v1530 = vadd.f32 0.0, %v1529
        %1531 = vmatmul.bf16.gmra.mxu0 %v1376
        %v1532 = vpop.f32.mrf.mxu0
        %v1533 = vadd.f32 0.0, %v1532
        %v1534 = vpop.f32.mrf.mxu0
        %v1535 = vadd.f32 0.0, %v1534
        %1536 = vmatmul.bf16.gmra.mxu0 %v1380
        %v1537 = vpop.f32.mrf.mxu0
        %v1538 = vadd.f32 0.0, %v1537
        %v1539 = vpop.f32.mrf.mxu0
        %v1540 = vadd.f32 0.0, %v1539
        %1541 = vmatmul.bf16.gmra.mxu0 %v1384
        %v1542 = vpop.f32.mrf.mxu0
        %v1543 = vadd.f32 0.0, %v1542
        %v1544 = vpop.f32.mrf.mxu0
        %v1545 = vadd.f32 0.0, %v1544
        %1546 = vmatmul.bf16.gmra.mxu0 %v1388
        %v1547 = vpop.f32.mrf.mxu0
        %v1548 = vadd.f32 0.0, %v1547
        %v1549 = vpop.f32.mrf.mxu0
        %v1550 = vadd.f32 0.0, %v1549
        %1551 = vmatmul.bf16.gmra.mxu0 %v1392
        %v1552 = vpop.f32.mrf.mxu0
        %v1553 = vadd.f32 0.0, %v1552
        %v1554 = vpop.f32.mrf.mxu0
        %v1555 = vadd.f32 0.0, %v1554
        %1556 = vmatmul.bf16.gmra.mxu0 %v1396
        %v1557 = vpop.f32.mrf.mxu0
        %v1558 = vadd.f32 0.0, %v1557
        %v1559 = vpop.f32.mrf.mxu0
        %v1560 = vadd.f32 0.0, %v1559
        %1561 = vmatmul.bf16.gmra.mxu0 %v1400
        %v1562 = vpop.f32.mrf.mxu0
        %v1563 = vadd.f32 0.0, %v1562
        %v1564 = vpop.f32.mrf.mxu0
        %v1565 = vadd.f32 0.0, %v1564
        %1566 = vmatmul.bf16.gmra.mxu0 %v1404
        %v1567 = vpop.f32.mrf.mxu0
        %v1568 = vadd.f32 0.0, %v1567
        %v1569 = vpop.f32.mrf.mxu0
        %v1570 = vadd.f32 0.0, %v1569
        %1571 = vmatmul.bf16.gmra.mxu0 %v1408
        %v1572 = vpop.f32.mrf.mxu0
        %v1573 = vadd.f32 0.0, %v1572
        %v1574 = vpop.f32.mrf.mxu0
        %v1575 = vadd.f32 0.0, %v1574
        %1576 = vmatmul.bf16.gmra.mxu0 %v1412
        %v1577 = vpop.f32.mrf.mxu0
        %v1578 = vadd.f32 0.0, %v1577
        %v1579 = vpop.f32.mrf.mxu0
        %v1580 = vadd.f32 0.0, %v1579
        %1581 = vmatmul.bf16.gmra.mxu0 %v1416
        %v1582 = vpop.f32.mrf.mxu0
        %v1583 = vadd.f32 0.0, %v1582
        %v1584 = vpop.f32.mrf.mxu0
        %v1585 = vadd.f32 0.0, %v1584
        %1586 = vmatmul.bf16.gmra.mxu0 %v1420
        %v1587 = vpop.f32.mrf.mxu0
        %v1588 = vadd.f32 0.0, %v1587
        %v1589 = vpop.f32.mrf.mxu0
        %v1590 = vadd.f32 0.0, %v1589
        %1591 = vmatmul.bf16.gmra.mxu0 %v1424
        %v1592 = vpop.f32.mrf.mxu0
        %v1593 = vadd.f32 0.0, %v1592
        %v1594 = vpop.f32.mrf.mxu0
        %v1595 = vadd.f32 0.0, %v1594
        %1596 = vmatmul.bf16.gmra.mxu0 %v1428
        %v1597 = vpop.f32.mrf.mxu0
        %v1598 = vadd.f32 0.0, %v1597
        %v1599 = vpop.f32.mrf.mxu0
        %v1600 = vadd.f32 0.0, %v1599
        %1601 = vmatmul.bf16.gmra.mxu0 %v1437
        %v1602 = vpop.f32.mrf.mxu0
        %v1603 = vadd.f32 0.0, %v1602
        %v1604 = vpop.f32.mrf.mxu0
        %v1605 = vadd.f32 0.0, %v1604
        %1606 = vmatmul.bf16.gmra.mxu0 %v1446
        %v1607 = vpop.f32.mrf.mxu0
        %v1608 = vadd.f32 0.0, %v1607
        %v1609 = vpop.f32.mrf.mxu0
        %v1610 = vadd.f32 0.0, %v1609
        %1611 = vdwg.mxu0
        %v1612 = vadd.f32 %v1325, %v1523
        %v1613 = vadd.f32 %v1326, %v1525
        %v1614 = vadd.f32 %v1327, %v1528
        %v1615 = vadd.f32 %v1328, %v1530
        %v1616 = vadd.f32 %v1329, %v1533
        %v1617 = vadd.f32 %v1330, %v1535
        %v1618 = vadd.f32 %v1331, %v1538
        %v1619 = vadd.f32 %v1332, %v1540
        %v1620 = vadd.f32 %v1333, %v1543
        %v1621 = vadd.f32 %v1334, %v1545
        %v1622 = vadd.f32 %v1335, %v1548
        %v1623 = vadd.f32 %v1336, %v1550
        %v1624 = vadd.f32 %v1337, %v1553
        %v1625 = vadd.f32 %v1338, %v1555
        %v1626 = vadd.f32 %v1339, %v1558
        %v1627 = vadd.f32 %v1340, %v1560
        %v1628 = vadd.f32 %v1341, %v1563
        %v1629 = vadd.f32 %v1342, %v1565
        %v1630 = vadd.f32 %v1343, %v1568
        %v1631 = vadd.f32 %v1344, %v1570
        %v1632 = vadd.f32 %v1345, %v1573
        %v1633 = vadd.f32 %v1346, %v1575
        %v1634 = vadd.f32 %v1347, %v1578
        %v1635 = vadd.f32 %v1348, %v1580
        %v1636 = vadd.f32 %v1349, %v1583
        %v1637 = vadd.f32 %v1350, %v1585
        %v1638 = vadd.f32 %v1351, %v1588
        %v1639 = vadd.f32 %v1352, %v1590
        %v1640 = vadd.f32 %v1353, %v1593
        %v1641 = vadd.f32 %v1354, %v1595
        %v1642 = vadd.f32 %v1355, %v1598
        %v1643 = vadd.f32 %v1356, %v1600
        %v1644 = vadd.f32 %v1357, %v1603
        %v1645 = vadd.f32 %v1358, %v1605
        %v1646 = vadd.f32 %v1359, %v1608
        %v1647 = vadd.f32 %v1360, %v1610
        %vm1648 = vcmask 1045504
        %v1649 = vrot.slane %v430, 2
        %v1650 = vrot.slane %v431, 2
        %v1651 = vsel %vm1648, %v1649, %v1650
        %v1652 = vrot.slane %v432, 2
        %v1653 = vsel %vm1648, %v1650, %v1652
        %v1654 = vrot.slane %v433, 2
        %v1655 = vsel %vm1648, %v1652, %v1654
        %v1656 = vrot.slane %v434, 2
        %v1657 = vsel %vm1648, %v1654, %v1656
        %v1658 = vrot.slane %v435, 2
        %v1659 = vsel %vm1648, %v1656, %v1658
        %v1660 = vrot.slane %v436, 2
        %v1661 = vsel %vm1648, %v1658, %v1660
        %v1662 = vrot.slane %v437, 2
        %v1663 = vsel %vm1648, %v1660, %v1662
        %v1664 = vrot.slane %v438, 2
        %v1665 = vsel %vm1648, %v1662, %v1664
        %v1666 = vrot.slane %v439, 2
        %v1667 = vsel %vm1648, %v1664, %v1666
        %v1668 = vrot.slane %v440, 2
        %v1669 = vsel %vm1648, %v1666, %v1668
        %v1670 = vrot.slane %v441, 2
        %v1671 = vsel %vm1648, %v1668, %v1670
        %v1672 = vrot.slane %v442, 2
        %v1673 = vsel %vm1648, %v1670, %v1672
        %v1674 = vrot.slane %v443, 2
        %v1675 = vsel %vm1648, %v1672, %v1674
        %v1676 = vrot.slane %v444, 2
        %v1677 = vsel %vm1648, %v1674, %v1676
        %v1678 = vrot.slane %v445, 2
        %v1679 = vsel %vm1648, %v1676, %v1678
        %v1680 = vrot.slane %v446, 2
        %v1681 = vsel %vm1648, %v1678, %v1680
        %v1682 = vrot.slane %v1170, 2
        %v1683 = vsel %vm1648, %v1680, %v1682
        %v1684 = vrot.slane %v1171, 2
        %v1685 = vsel %vm1648, %v1682, %v1684
        %v1720 = vunpack.c.l.b16 %v290
        %v1721 = vunpack.c.l.b16 %v291
        %v1722 = vunpack.c.l.b16 %v292
        %v1723 = vunpack.c.l.b16 %v293
        %v1724 = vunpack.c.l.b16 %v294
        %v1725 = vunpack.c.l.b16 %v295
        %v1726 = vunpack.c.l.b16 %v296
        %v1727 = vunpack.c.l.b16 %v297
        %v1728 = vunpack.c.l.b16 %v298
        %v1729 = vunpack.c.l.b16 %v299
        %v1730 = vunpack.c.l.b16 %v300
        %v1731 = vunpack.c.l.b16 %v301
        %v1732 = vunpack.c.l.b16 %v302
        %v1733 = vunpack.c.l.b16 %v303
        %v1734 = vunpack.c.l.b16 %v304
        %v1735 = vunpack.c.l.b16 %v305
        %v1736 = vpack.c.b16 %v1721, %v1720
        %v1737 = vpack.c.b16 %v1723, %v1722
        %v1738 = vpack.c.b16 %v1725, %v1724
        %v1739 = vpack.c.b16 %v1727, %v1726
        %v1740 = vpack.c.b16 %v1729, %v1728
        %v1741 = vpack.c.b16 %v1731, %v1730
        %v1742 = vpack.c.b16 %v1733, %v1732
        %v1743 = vpack.c.b16 %v1735, %v1734
        %1752 = vmatpush.bf16.msra.mxu0 %v1743
        %1753 = vmatpush.bf16.msra.mxu0 %v1742
        %1754 = vmatpush.bf16.msra.mxu0 %v1741
        %1755 = vmatpush.bf16.msra.mxu0 %v1740
        %1756 = vmatpush.bf16.msra.mxu0 %v1739
        %1757 = vmatpush.bf16.msra.mxu0 %v1738
        %1758 = vmatpush.bf16.msra.mxu0 %v1737
        %1759 = vmatpush.bf16.msra.mxu0 %v1736
        %1760 = vmatmul.bf16.gmra.mxu0 %v1651
        %v1761 = vpop.f32.mrf.mxu0
        %v1762 = vadd.f32 0.0, %v1761
        %v1763 = vpop.f32.mrf.mxu0
        %v1764 = vadd.f32 0.0, %v1763
        %1765 = vmatmul.bf16.gmra.mxu0 %v1653
        %v1766 = vpop.f32.mrf.mxu0
        %v1767 = vadd.f32 0.0, %v1766
        %v1768 = vpop.f32.mrf.mxu0
        %v1769 = vadd.f32 0.0, %v1768
        %1770 = vmatmul.bf16.gmra.mxu0 %v1655
        %v1771 = vpop.f32.mrf.mxu0
        %v1772 = vadd.f32 0.0, %v1771
        %v1773 = vpop.f32.mrf.mxu0
        %v1774 = vadd.f32 0.0, %v1773
        %1775 = vmatmul.bf16.gmra.mxu0 %v1657
        %v1776 = vpop.f32.mrf.mxu0
        %v1777 = vadd.f32 0.0, %v1776
        %v1778 = vpop.f32.mrf.mxu0
        %v1779 = vadd.f32 0.0, %v1778
        %1780 = vmatmul.bf16.gmra.mxu0 %v1659
        %v1781 = vpop.f32.mrf.mxu0
        %v1782 = vadd.f32 0.0, %v1781
        %v1783 = vpop.f32.mrf.mxu0
        %v1784 = vadd.f32 0.0, %v1783
        %1785 = vmatmul.bf16.gmra.mxu0 %v1661
        %v1786 = vpop.f32.mrf.mxu0
        %v1787 = vadd.f32 0.0, %v1786
        %v1788 = vpop.f32.mrf.mxu0
        %v1789 = vadd.f32 0.0, %v1788
        %1790 = vmatmul.bf16.gmra.mxu0 %v1663
        %v1791 = vpop.f32.mrf.mxu0
        %v1792 = vadd.f32 0.0, %v1791
        %v1793 = vpop.f32.mrf.mxu0
        %v1794 = vadd.f32 0.0, %v1793
        %1795 = vmatmul.bf16.gmra.mxu0 %v1665
        %v1796 = vpop.f32.mrf.mxu0
        %v1797 = vadd.f32 0.0, %v1796
        %v1798 = vpop.f32.mrf.mxu0
        %v1799 = vadd.f32 0.0, %v1798
        %1800 = vmatmul.bf16.gmra.mxu0 %v1667
        %v1801 = vpop.f32.mrf.mxu0
        %v1802 = vadd.f32 0.0, %v1801
        %v1803 = vpop.f32.mrf.mxu0
        %v1804 = vadd.f32 0.0, %v1803
        %1805 = vmatmul.bf16.gmra.mxu0 %v1669
        %v1806 = vpop.f32.mrf.mxu0
        %v1807 = vadd.f32 0.0, %v1806
        %v1808 = vpop.f32.mrf.mxu0
        %v1809 = vadd.f32 0.0, %v1808
        %1810 = vmatmul.bf16.gmra.mxu0 %v1671
        %v1811 = vpop.f32.mrf.mxu0
        %v1812 = vadd.f32 0.0, %v1811
        %v1813 = vpop.f32.mrf.mxu0
        %v1814 = vadd.f32 0.0, %v1813
        %1815 = vmatmul.bf16.gmra.mxu0 %v1673
        %v1816 = vpop.f32.mrf.mxu0
        %v1817 = vadd.f32 0.0, %v1816
        %v1818 = vpop.f32.mrf.mxu0
        %v1819 = vadd.f32 0.0, %v1818
        %1820 = vmatmul.bf16.gmra.mxu0 %v1675
        %v1821 = vpop.f32.mrf.mxu0
        %v1822 = vadd.f32 0.0, %v1821
        %v1823 = vpop.f32.mrf.mxu0
        %v1824 = vadd.f32 0.0, %v1823
        %1825 = vmatmul.bf16.gmra.mxu0 %v1677
        %v1826 = vpop.f32.mrf.mxu0
        %v1827 = vadd.f32 0.0, %v1826
        %v1828 = vpop.f32.mrf.mxu0
        %v1829 = vadd.f32 0.0, %v1828
        %1830 = vmatmul.bf16.gmra.mxu0 %v1679
        %v1831 = vpop.f32.mrf.mxu0
        %v1832 = vadd.f32 0.0, %v1831
        %v1833 = vpop.f32.mrf.mxu0
        %v1834 = vadd.f32 0.0, %v1833
        %1835 = vmatmul.bf16.gmra.mxu0 %v1681
        %v1836 = vpop.f32.mrf.mxu0
        %v1837 = vadd.f32 0.0, %v1836
        %v1838 = vpop.f32.mrf.mxu0
        %v1839 = vadd.f32 0.0, %v1838
        %1840 = vmatmul.bf16.gmra.mxu0 %v1683
        %v1841 = vpop.f32.mrf.mxu0
        %v1842 = vadd.f32 0.0, %v1841
        %v1843 = vpop.f32.mrf.mxu0
        %v1844 = vadd.f32 0.0, %v1843
        %1845 = vmatmul.bf16.gmra.mxu0 %v1685
        %v1846 = vpop.f32.mrf.mxu0
        %v1847 = vadd.f32 0.0, %v1846
        %v1848 = vpop.f32.mrf.mxu0
        %v1849 = vadd.f32 0.0, %v1848
        %1850 = vdwg.mxu0
        %v1851 = vadd.f32 %v1612, %v1762
        %v1852 = vadd.f32 %v1613, %v1764
        %v1853 = vadd.f32 %v1614, %v1767
        %v1854 = vadd.f32 %v1615, %v1769
        %v1855 = vadd.f32 %v1616, %v1772
        %v1856 = vadd.f32 %v1617, %v1774
        %v1857 = vadd.f32 %v1618, %v1777
        %v1858 = vadd.f32 %v1619, %v1779
        %v1859 = vadd.f32 %v1620, %v1782
        %v1860 = vadd.f32 %v1621, %v1784
        %v1861 = vadd.f32 %v1622, %v1787
        %v1862 = vadd.f32 %v1623, %v1789
        %v1863 = vadd.f32 %v1624, %v1792
        %v1864 = vadd.f32 %v1625, %v1794
        %v1865 = vadd.f32 %v1626, %v1797
        %v1866 = vadd.f32 %v1627, %v1799
        %v1867 = vadd.f32 %v1628, %v1802
        %v1868 = vadd.f32 %v1629, %v1804
        %v1869 = vadd.f32 %v1630, %v1807
        %v1870 = vadd.f32 %v1631, %v1809
        %v1871 = vadd.f32 %v1632, %v1812
        %v1872 = vadd.f32 %v1633, %v1814
        %v1873 = vadd.f32 %v1634, %v1817
        %v1874 = vadd.f32 %v1635, %v1819
        %v1875 = vadd.f32 %v1636, %v1822
        %v1876 = vadd.f32 %v1637, %v1824
        %v1877 = vadd.f32 %v1638, %v1827
        %v1878 = vadd.f32 %v1639, %v1829
        %v1879 = vadd.f32 %v1640, %v1832
        %v1880 = vadd.f32 %v1641, %v1834
        %v1881 = vadd.f32 %v1642, %v1837
        %v1882 = vadd.f32 %v1643, %v1839
        %v1883 = vadd.f32 %v1644, %v1842
        %v1884 = vadd.f32 %v1645, %v1844
        %v1885 = vadd.f32 %v1646, %v1847
        %v1886 = vadd.f32 %v1647, %v1849
        %v1889 = vunpack.c.l.b16 %v208
        %v1890 = vunpack.c.l.b16 %v209
        %v1891 = vpack.c.b16 %v1889, %v1169
        %v1892 = vpack.c.b16 %v1890, %v1890
        %v1893 = vrot.slane %v1891, 2
        %v1894 = vsel %vm1648, %v1682, %v1893
        %v1895 = vrot.slane %v1892, 2
        %v1896 = vsel %vm1648, %v1893, %v1895
        %v1915 = vunpack.c.l.b16 %v306
        %v1916 = vunpack.c.l.b16 %v307
        %v1917 = vunpack.c.l.b16 %v308
        %v1918 = vunpack.c.l.b16 %v309
        %v1919 = vunpack.c.l.b16 %v310
        %v1920 = vunpack.c.l.b16 %v311
        %v1921 = vunpack.c.l.b16 %v312
        %v1922 = vunpack.c.l.b16 %v313
        %v1923 = vunpack.c.l.b16 %v314
        %v1924 = vunpack.c.l.b16 %v315
        %v1925 = vunpack.c.l.b16 %v316
        %v1926 = vunpack.c.l.b16 %v317
        %v1927 = vunpack.c.l.b16 %v318
        %v1928 = vunpack.c.l.b16 %v319
        %v1929 = vunpack.c.l.b16 %v320
        %v1930 = vunpack.c.l.b16 %v321
        %v1931 = vpack.c.b16 %v1916, %v1915
        %v1932 = vpack.c.b16 %v1918, %v1917
        %v1933 = vpack.c.b16 %v1920, %v1919
        %v1934 = vpack.c.b16 %v1922, %v1921
        %v1935 = vpack.c.b16 %v1924, %v1923
        %v1936 = vpack.c.b16 %v1926, %v1925
        %v1937 = vpack.c.b16 %v1928, %v1927
        %v1938 = vpack.c.b16 %v1930, %v1929
        %1947 = vmatpush.bf16.msra.mxu0 %v1938
        %1948 = vmatpush.bf16.msra.mxu0 %v1937
        %1949 = vmatpush.bf16.msra.mxu0 %v1936
        %1950 = vmatpush.bf16.msra.mxu0 %v1935
        %1951 = vmatpush.bf16.msra.mxu0 %v1934
        %1952 = vmatpush.bf16.msra.mxu0 %v1933
        %1953 = vmatpush.bf16.msra.mxu0 %v1932
        %1954 = vmatpush.bf16.msra.mxu0 %v1931
        %1955 = vmatmul.bf16.gmra.mxu0 %v1653
        %v1956 = vpop.f32.mrf.mxu0
        %v1957 = vadd.f32 0.0, %v1956
        %v1958 = vpop.f32.mrf.mxu0
        %v1959 = vadd.f32 0.0, %v1958
        %1960 = vmatmul.bf16.gmra.mxu0 %v1655
        %v1961 = vpop.f32.mrf.mxu0
        %v1962 = vadd.f32 0.0, %v1961
        %v1963 = vpop.f32.mrf.mxu0
        %v1964 = vadd.f32 0.0, %v1963
        %1965 = vmatmul.bf16.gmra.mxu0 %v1657
        %v1966 = vpop.f32.mrf.mxu0
        %v1967 = vadd.f32 0.0, %v1966
        %v1968 = vpop.f32.mrf.mxu0
        %v1969 = vadd.f32 0.0, %v1968
        %1970 = vmatmul.bf16.gmra.mxu0 %v1659
        %v1971 = vpop.f32.mrf.mxu0
        %v1972 = vadd.f32 0.0, %v1971
        %v1973 = vpop.f32.mrf.mxu0
        %v1974 = vadd.f32 0.0, %v1973
        %1975 = vmatmul.bf16.gmra.mxu0 %v1661
        %v1976 = vpop.f32.mrf.mxu0
        %v1977 = vadd.f32 0.0, %v1976
        %v1978 = vpop.f32.mrf.mxu0
        %v1979 = vadd.f32 0.0, %v1978
        %1980 = vmatmul.bf16.gmra.mxu0 %v1663
        %v1981 = vpop.f32.mrf.mxu0
        %v1982 = vadd.f32 0.0, %v1981
        %v1983 = vpop.f32.mrf.mxu0
        %v1984 = vadd.f32 0.0, %v1983
        %1985 = vmatmul.bf16.gmra.mxu0 %v1665
        %v1986 = vpop.f32.mrf.mxu0
        %v1987 = vadd.f32 0.0, %v1986
        %v1988 = vpop.f32.mrf.mxu0
        %v1989 = vadd.f32 0.0, %v1988
        %1990 = vmatmul.bf16.gmra.mxu0 %v1667
        %v1991 = vpop.f32.mrf.mxu0
        %v1992 = vadd.f32 0.0, %v1991
        %v1993 = vpop.f32.mrf.mxu0
        %v1994 = vadd.f32 0.0, %v1993
        %1995 = vmatmul.bf16.gmra.mxu0 %v1669
        %v1996 = vpop.f32.mrf.mxu0
        %v1997 = vadd.f32 0.0, %v1996
        %v1998 = vpop.f32.mrf.mxu0
        %v1999 = vadd.f32 0.0, %v1998
        %2000 = vmatmul.bf16.gmra.mxu0 %v1671
        %v2001 = vpop.f32.mrf.mxu0
        %v2002 = vadd.f32 0.0, %v2001
        %v2003 = vpop.f32.mrf.mxu0
        %v2004 = vadd.f32 0.0, %v2003
        %2005 = vmatmul.bf16.gmra.mxu0 %v1673
        %v2006 = vpop.f32.mrf.mxu0
        %v2007 = vadd.f32 0.0, %v2006
        %v2008 = vpop.f32.mrf.mxu0
        %v2009 = vadd.f32 0.0, %v2008
        %2010 = vmatmul.bf16.gmra.mxu0 %v1675
        %v2011 = vpop.f32.mrf.mxu0
        %v2012 = vadd.f32 0.0, %v2011
        %v2013 = vpop.f32.mrf.mxu0
        %v2014 = vadd.f32 0.0, %v2013
        %2015 = vmatmul.bf16.gmra.mxu0 %v1677
        %v2016 = vpop.f32.mrf.mxu0
        %v2017 = vadd.f32 0.0, %v2016
        %v2018 = vpop.f32.mrf.mxu0
        %v2019 = vadd.f32 0.0, %v2018
        %2020 = vmatmul.bf16.gmra.mxu0 %v1679
        %v2021 = vpop.f32.mrf.mxu0
        %v2022 = vadd.f32 0.0, %v2021
        %v2023 = vpop.f32.mrf.mxu0
        %v2024 = vadd.f32 0.0, %v2023
        %2025 = vmatmul.bf16.gmra.mxu0 %v1681
        %v2026 = vpop.f32.mrf.mxu0
        %v2027 = vadd.f32 0.0, %v2026
        %v2028 = vpop.f32.mrf.mxu0
        %v2029 = vadd.f32 0.0, %v2028
        %2030 = vmatmul.bf16.gmra.mxu0 %v1683
        %v2031 = vpop.f32.mrf.mxu0
        %v2032 = vadd.f32 0.0, %v2031
        %v2033 = vpop.f32.mrf.mxu0
        %v2034 = vadd.f32 0.0, %v2033
        %2035 = vmatmul.bf16.gmra.mxu0 %v1894
        %v2036 = vpop.f32.mrf.mxu0
        %v2037 = vadd.f32 0.0, %v2036
        %v2038 = vpop.f32.mrf.mxu0
        %v2039 = vadd.f32 0.0, %v2038
        %2040 = vmatmul.bf16.gmra.mxu0 %v1896
        %v2041 = vpop.f32.mrf.mxu0
        %v2042 = vadd.f32 0.0, %v2041
        %v2043 = vpop.f32.mrf.mxu0
        %v2044 = vadd.f32 0.0, %v2043
        %2045 = vdwg.mxu0
        %v2046 = vadd.f32 %v1851, %v1957
        %v2047 = vadd.f32 %v1852, %v1959
        %v2048 = vadd.f32 %v1853, %v1962
        %v2049 = vadd.f32 %v1854, %v1964
        %v2050 = vadd.f32 %v1855, %v1967
        %v2051 = vadd.f32 %v1856, %v1969
        %v2052 = vadd.f32 %v1857, %v1972
        %v2053 = vadd.f32 %v1858, %v1974
        %v2054 = vadd.f32 %v1859, %v1977
        %v2055 = vadd.f32 %v1860, %v1979
        %v2056 = vadd.f32 %v1861, %v1982
        %v2057 = vadd.f32 %v1862, %v1984
        %v2058 = vadd.f32 %v1863, %v1987
        %v2059 = vadd.f32 %v1864, %v1989
        %v2060 = vadd.f32 %v1865, %v1992
        %v2061 = vadd.f32 %v1866, %v1994
        %v2062 = vadd.f32 %v1867, %v1997
        %v2063 = vadd.f32 %v1868, %v1999
        %v2064 = vadd.f32 %v1869, %v2002
        %v2065 = vadd.f32 %v1870, %v2004
        %v2066 = vadd.f32 %v1871, %v2007
        %v2067 = vadd.f32 %v1872, %v2009
        %v2068 = vadd.f32 %v1873, %v2012
        %v2069 = vadd.f32 %v1874, %v2014
        %v2070 = vadd.f32 %v1875, %v2017
        %v2071 = vadd.f32 %v1876, %v2019
        %v2072 = vadd.f32 %v1877, %v2022
        %v2073 = vadd.f32 %v1878, %v2024
        %v2074 = vadd.f32 %v1879, %v2027
        %v2075 = vadd.f32 %v1880, %v2029
        %v2076 = vadd.f32 %v1881, %v2032
        %v2077 = vadd.f32 %v1882, %v2034
        %v2078 = vadd.f32 %v1883, %v2037
        %v2079 = vadd.f32 %v1884, %v2039
        %v2080 = vadd.f32 %v1885, %v2042
        %v2081 = vadd.f32 %v1886, %v2044
        %vm2082 = vsmask.f32 5376
        %v2083 = vrot.slane %v469, 2
        %v2084 = vrot.slane %v465, 3
        %v2085 = vor.u32 %v2083, %v2084
        %v2086 = vrot.slane %v477, 2
        %v2087 = vrot.slane %v473, 3
        %v2088 = vor.u32 %v2086, %v2087
        %v2089 = vsel %vm2082, %v2085, %v2088
        %v2090 = vrot.slane %v485, 2
        %v2091 = vrot.slane %v481, 3
        %v2092 = vor.u32 %v2090, %v2091
        %v2093 = vsel %vm2082, %v2088, %v2092
        %v2094 = vrot.slane %v493, 2
        %v2095 = vrot.slane %v489, 3
        %v2096 = vor.u32 %v2094, %v2095
        %v2097 = vsel %vm2082, %v2092, %v2096
        %v2098 = vrot.slane %v501, 2
        %v2099 = vrot.slane %v497, 3
        %v2100 = vor.u32 %v2098, %v2099
        %v2101 = vsel %vm2082, %v2096, %v2100
        %v2102 = vrot.slane %v509, 2
        %v2103 = vrot.slane %v505, 3
        %v2104 = vor.u32 %v2102, %v2103
        %v2105 = vsel %vm2082, %v2100, %v2104
        %v2106 = vrot.slane %v517, 2
        %v2107 = vrot.slane %v513, 3
        %v2108 = vor.u32 %v2106, %v2107
        %v2109 = vsel %vm2082, %v2104, %v2108
        %v2110 = vrot.slane %v525, 2
        %v2111 = vrot.slane %v521, 3
        %v2112 = vor.u32 %v2110, %v2111
        %v2113 = vsel %vm2082, %v2108, %v2112
        %v2114 = vrot.slane %v533, 2
        %v2115 = vrot.slane %v529, 3
        %v2116 = vor.u32 %v2114, %v2115
        %v2117 = vsel %vm2082, %v2112, %v2116
        %v2118 = vrot.slane %v541, 2
        %v2119 = vrot.slane %v537, 3
        %v2120 = vor.u32 %v2118, %v2119
        %v2121 = vsel %vm2082, %v2116, %v2120
        %v2122 = vrot.slane %v549, 2
        %v2123 = vrot.slane %v545, 3
        %v2124 = vor.u32 %v2122, %v2123
        %v2125 = vsel %vm2082, %v2120, %v2124
        %v2126 = vrot.slane %v557, 2
        %v2127 = vrot.slane %v553, 3
        %v2128 = vor.u32 %v2126, %v2127
        %v2129 = vsel %vm2082, %v2124, %v2128
        %v2130 = vrot.slane %v565, 2
        %v2131 = vrot.slane %v561, 3
        %v2132 = vor.u32 %v2130, %v2131
        %v2133 = vsel %vm2082, %v2128, %v2132
        %v2134 = vrot.slane %v573, 2
        %v2135 = vrot.slane %v569, 3
        %v2136 = vor.u32 %v2134, %v2135
        %v2137 = vsel %vm2082, %v2132, %v2136
        %v2138 = vrot.slane %v581, 2
        %v2139 = vrot.slane %v577, 3
        %v2140 = vor.u32 %v2138, %v2139
        %v2141 = vsel %vm2082, %v2136, %v2140
        %v2142 = vrot.slane %v589, 2
        %v2143 = vrot.slane %v585, 3
        %v2144 = vor.u32 %v2142, %v2143
        %v2145 = vsel %vm2082, %v2140, %v2144
        %v2146 = vrot.slane %v1430, 2
        %v2147 = vrot.slane %v1433, 3
        %v2148 = vor.u32 %v2146, %v2147
        %v2149 = vsel %vm2082, %v2144, %v2148
        %v2151 = vshrl.u32 %v1891, 16
        %v2153 = vrot.slane %v2151, 2
        %v2154 = vshll.u32 %v1891, 16
        %v2156 = vrot.slane %v2154, 3
        %v2157 = vor.u32 %v2153, %v2156
        %v2158 = vsel %vm2082, %v2148, %v2157
        %v2160 = vshrl.u32 %v1892, 16
        %v2162 = vrot.slane %v2160, 2
        %v2163 = vshll.u32 %v1892, 16
        %v2165 = vrot.slane %v2163, 3
        %v2166 = vor.u32 %v2162, %v2165
        %v2167 = vsel %vm2082, %v2157, %v2166
        %v2202 = vunpack.c.l.b16 %v322
        %v2203 = vunpack.c.l.b16 %v323
        %v2204 = vunpack.c.l.b16 %v324
        %v2205 = vunpack.c.l.b16 %v325
        %v2206 = vunpack.c.l.b16 %v326
        %v2207 = vunpack.c.l.b16 %v327
        %v2208 = vunpack.c.l.b16 %v328
        %v2209 = vunpack.c.l.b16 %v329
        %v2210 = vunpack.c.l.b16 %v330
        %v2211 = vunpack.c.l.b16 %v331
        %v2212 = vunpack.c.l.b16 %v332
        %v2213 = vunpack.c.l.b16 %v333
        %v2214 = vunpack.c.l.b16 %v334
        %v2215 = vunpack.c.l.b16 %v335
        %v2216 = vunpack.c.l.b16 %v336
        %v2217 = vunpack.c.l.b16 %v337
        %v2218 = vpack.c.b16 %v2203, %v2202
        %v2219 = vpack.c.b16 %v2205, %v2204
        %v2220 = vpack.c.b16 %v2207, %v2206
        %v2221 = vpack.c.b16 %v2209, %v2208
        %v2222 = vpack.c.b16 %v2211, %v2210
        %v2223 = vpack.c.b16 %v2213, %v2212
        %v2224 = vpack.c.b16 %v2215, %v2214
        %v2225 = vpack.c.b16 %v2217, %v2216
        %2234 = vmatpush.bf16.msra.mxu0 %v2225
        %2235 = vmatpush.bf16.msra.mxu0 %v2224
        %2236 = vmatpush.bf16.msra.mxu0 %v2223
        %2237 = vmatpush.bf16.msra.mxu0 %v2222
        %2238 = vmatpush.bf16.msra.mxu0 %v2221
        %2239 = vmatpush.bf16.msra.mxu0 %v2220
        %2240 = vmatpush.bf16.msra.mxu0 %v2219
        %2241 = vmatpush.bf16.msra.mxu0 %v2218
        %2242 = vmatmul.bf16.gmra.mxu0 %v2089
        %v2243 = vpop.f32.mrf.mxu0
        %v2244 = vadd.f32 0.0, %v2243
        %v2245 = vpop.f32.mrf.mxu0
        %v2246 = vadd.f32 0.0, %v2245
        %2247 = vmatmul.bf16.gmra.mxu0 %v2093
        %v2248 = vpop.f32.mrf.mxu0
        %v2249 = vadd.f32 0.0, %v2248
        %v2250 = vpop.f32.mrf.mxu0
        %v2251 = vadd.f32 0.0, %v2250
        %2252 = vmatmul.bf16.gmra.mxu0 %v2097
        %v2253 = vpop.f32.mrf.mxu0
        %v2254 = vadd.f32 0.0, %v2253
        %v2255 = vpop.f32.mrf.mxu0
        %v2256 = vadd.f32 0.0, %v2255
        %2257 = vmatmul.bf16.gmra.mxu0 %v2101
        %v2258 = vpop.f32.mrf.mxu0
        %v2259 = vadd.f32 0.0, %v2258
        %v2260 = vpop.f32.mrf.mxu0
        %v2261 = vadd.f32 0.0, %v2260
        %2262 = vmatmul.bf16.gmra.mxu0 %v2105
        %v2263 = vpop.f32.mrf.mxu0
        %v2264 = vadd.f32 0.0, %v2263
        %v2265 = vpop.f32.mrf.mxu0
        %v2266 = vadd.f32 0.0, %v2265
        %2267 = vmatmul.bf16.gmra.mxu0 %v2109
        %v2268 = vpop.f32.mrf.mxu0
        %v2269 = vadd.f32 0.0, %v2268
        %v2270 = vpop.f32.mrf.mxu0
        %v2271 = vadd.f32 0.0, %v2270
        %2272 = vmatmul.bf16.gmra.mxu0 %v2113
        %v2273 = vpop.f32.mrf.mxu0
        %v2274 = vadd.f32 0.0, %v2273
        %v2275 = vpop.f32.mrf.mxu0
        %v2276 = vadd.f32 0.0, %v2275
        %2277 = vmatmul.bf16.gmra.mxu0 %v2117
        %v2278 = vpop.f32.mrf.mxu0
        %v2279 = vadd.f32 0.0, %v2278
        %v2280 = vpop.f32.mrf.mxu0
        %v2281 = vadd.f32 0.0, %v2280
        %2282 = vmatmul.bf16.gmra.mxu0 %v2121
        %v2283 = vpop.f32.mrf.mxu0
        %v2284 = vadd.f32 0.0, %v2283
        %v2285 = vpop.f32.mrf.mxu0
        %v2286 = vadd.f32 0.0, %v2285
        %2287 = vmatmul.bf16.gmra.mxu0 %v2125
        %v2288 = vpop.f32.mrf.mxu0
        %v2289 = vadd.f32 0.0, %v2288
        %v2290 = vpop.f32.mrf.mxu0
        %v2291 = vadd.f32 0.0, %v2290
        %2292 = vmatmul.bf16.gmra.mxu0 %v2129
        %v2293 = vpop.f32.mrf.mxu0
        %v2294 = vadd.f32 0.0, %v2293
        %v2295 = vpop.f32.mrf.mxu0
        %v2296 = vadd.f32 0.0, %v2295
        %2297 = vmatmul.bf16.gmra.mxu0 %v2133
        %v2298 = vpop.f32.mrf.mxu0
        %v2299 = vadd.f32 0.0, %v2298
        %v2300 = vpop.f32.mrf.mxu0
        %v2301 = vadd.f32 0.0, %v2300
        %2302 = vmatmul.bf16.gmra.mxu0 %v2137
        %v2303 = vpop.f32.mrf.mxu0
        %v2304 = vadd.f32 0.0, %v2303
        %v2305 = vpop.f32.mrf.mxu0
        %v2306 = vadd.f32 0.0, %v2305
        %2307 = vmatmul.bf16.gmra.mxu0 %v2141
        %v2308 = vpop.f32.mrf.mxu0
        %v2309 = vadd.f32 0.0, %v2308
        %v2310 = vpop.f32.mrf.mxu0
        %v2311 = vadd.f32 0.0, %v2310
        %2312 = vmatmul.bf16.gmra.mxu0 %v2145
        %v2313 = vpop.f32.mrf.mxu0
        %v2314 = vadd.f32 0.0, %v2313
        %v2315 = vpop.f32.mrf.mxu0
        %v2316 = vadd.f32 0.0, %v2315
        %2317 = vmatmul.bf16.gmra.mxu0 %v2149
        %v2318 = vpop.f32.mrf.mxu0
        %v2319 = vadd.f32 0.0, %v2318
        %v2320 = vpop.f32.mrf.mxu0
        %v2321 = vadd.f32 0.0, %v2320
        %2322 = vmatmul.bf16.gmra.mxu0 %v2158
        %v2323 = vpop.f32.mrf.mxu0
        %v2324 = vadd.f32 0.0, %v2323
        %v2325 = vpop.f32.mrf.mxu0
        %v2326 = vadd.f32 0.0, %v2325
        %2327 = vmatmul.bf16.gmra.mxu0 %v2167
        %v2328 = vpop.f32.mrf.mxu0
        %v2329 = vadd.f32 0.0, %v2328
        %v2330 = vpop.f32.mrf.mxu0
        %v2331 = vadd.f32 0.0, %v2330
        %2332 = vdwg.mxu0
        %v2333 = vadd.f32 %v2046, %v2244
        %v2334 = vadd.f32 %v2047, %v2246
        %v2335 = vadd.f32 %v2048, %v2249
        %v2336 = vadd.f32 %v2049, %v2251
        %v2337 = vadd.f32 %v2050, %v2254
        %v2338 = vadd.f32 %v2051, %v2256
        %v2339 = vadd.f32 %v2052, %v2259
        %v2340 = vadd.f32 %v2053, %v2261
        %v2341 = vadd.f32 %v2054, %v2264
        %v2342 = vadd.f32 %v2055, %v2266
        %v2343 = vadd.f32 %v2056, %v2269
        %v2344 = vadd.f32 %v2057, %v2271
        %v2345 = vadd.f32 %v2058, %v2274
        %v2346 = vadd.f32 %v2059, %v2276
        %v2347 = vadd.f32 %v2060, %v2279
        %v2348 = vadd.f32 %v2061, %v2281
        %v2349 = vadd.f32 %v2062, %v2284
        %v2350 = vadd.f32 %v2063, %v2286
        %v2351 = vadd.f32 %v2064, %v2289
        %v2352 = vadd.f32 %v2065, %v2291
        %v2353 = vadd.f32 %v2066, %v2294
        %v2354 = vadd.f32 %v2067, %v2296
        %v2355 = vadd.f32 %v2068, %v2299
        %v2356 = vadd.f32 %v2069, %v2301
        %v2357 = vadd.f32 %v2070, %v2304
        %v2358 = vadd.f32 %v2071, %v2306
        %v2359 = vadd.f32 %v2072, %v2309
        %v2360 = vadd.f32 %v2073, %v2311
        %v2361 = vadd.f32 %v2074, %v2314
        %v2362 = vadd.f32 %v2075, %v2316
        %v2363 = vadd.f32 %v2076, %v2319
        %v2364 = vadd.f32 %v2077, %v2321
        %v2365 = vadd.f32 %v2078, %v2324
        %v2366 = vadd.f32 %v2079, %v2326
        %v2367 = vadd.f32 %v2080, %v2329
        %v2368 = vadd.f32 %v2081, %v2331
        %vm2369 = vcmask 1044480
        %v2370 = vrot.slane %v431, 3
        %v2371 = vrot.slane %v432, 3
        %v2372 = vsel %vm2369, %v2370, %v2371
        %v2373 = vrot.slane %v433, 3
        %v2374 = vsel %vm2369, %v2371, %v2373
        %v2375 = vrot.slane %v434, 3
        %v2376 = vsel %vm2369, %v2373, %v2375
        %v2377 = vrot.slane %v435, 3
        %v2378 = vsel %vm2369, %v2375, %v2377
        %v2379 = vrot.slane %v436, 3
        %v2380 = vsel %vm2369, %v2377, %v2379
        %v2381 = vrot.slane %v437, 3
        %v2382 = vsel %vm2369, %v2379, %v2381
        %v2383 = vrot.slane %v438, 3
        %v2384 = vsel %vm2369, %v2381, %v2383
        %v2385 = vrot.slane %v439, 3
        %v2386 = vsel %vm2369, %v2383, %v2385
        %v2387 = vrot.slane %v440, 3
        %v2388 = vsel %vm2369, %v2385, %v2387
        %v2389 = vrot.slane %v441, 3
        %v2390 = vsel %vm2369, %v2387, %v2389
        %v2391 = vrot.slane %v442, 3
        %v2392 = vsel %vm2369, %v2389, %v2391
        %v2393 = vrot.slane %v443, 3
        %v2394 = vsel %vm2369, %v2391, %v2393
        %v2395 = vrot.slane %v444, 3
        %v2396 = vsel %vm2369, %v2393, %v2395
        %v2397 = vrot.slane %v445, 3
        %v2398 = vsel %vm2369, %v2395, %v2397
        %v2399 = vrot.slane %v446, 3
        %v2400 = vsel %vm2369, %v2397, %v2399
        %v2401 = vrot.slane %v1170, 3
        %v2402 = vsel %vm2369, %v2399, %v2401
        %v2403 = vrot.slane %v1891, 3
        %v2404 = vsel %vm2369, %v2401, %v2403
        %v2405 = vrot.slane %v1892, 3
        %v2406 = vsel %vm2369, %v2403, %v2405
        %v2441 = vunpack.c.l.b16 %v338
        %v2442 = vunpack.c.l.b16 %v339
        %v2443 = vunpack.c.l.b16 %v340
        %v2444 = vunpack.c.l.b16 %v341
        %v2445 = vunpack.c.l.b16 %v342
        %v2446 = vunpack.c.l.b16 %v343
        %v2447 = vunpack.c.l.b16 %v344
        %v2448 = vunpack.c.l.b16 %v345
        %v2449 = vunpack.c.l.b16 %v346
        %v2450 = vunpack.c.l.b16 %v347
        %v2451 = vunpack.c.l.b16 %v348
        %v2452 = vunpack.c.l.b16 %v349
        %v2453 = vunpack.c.l.b16 %v350
        %v2454 = vunpack.c.l.b16 %v351
        %v2455 = vunpack.c.l.b16 %v352
        %v2456 = vunpack.c.l.b16 %v353
        %v2457 = vpack.c.b16 %v2442, %v2441
        %v2458 = vpack.c.b16 %v2444, %v2443
        %v2459 = vpack.c.b16 %v2446, %v2445
        %v2460 = vpack.c.b16 %v2448, %v2447
        %v2461 = vpack.c.b16 %v2450, %v2449
        %v2462 = vpack.c.b16 %v2452, %v2451
        %v2463 = vpack.c.b16 %v2454, %v2453
        %v2464 = vpack.c.b16 %v2456, %v2455
        %2473 = vmatpush.bf16.msra.mxu0 %v2464
        %2474 = vmatpush.bf16.msra.mxu0 %v2463
        %2475 = vmatpush.bf16.msra.mxu0 %v2462
        %2476 = vmatpush.bf16.msra.mxu0 %v2461
        %2477 = vmatpush.bf16.msra.mxu0 %v2460
        %2478 = vmatpush.bf16.msra.mxu0 %v2459
        %2479 = vmatpush.bf16.msra.mxu0 %v2458
        %2480 = vmatpush.bf16.msra.mxu0 %v2457
        %2481 = vmatmul.bf16.gmra.mxu0 %v2372
        %v2482 = vpop.f32.mrf.mxu0
        %v2483 = vadd.f32 0.0, %v2482
        %v2484 = vpop.f32.mrf.mxu0
        %v2485 = vadd.f32 0.0, %v2484
        %2486 = vmatmul.bf16.gmra.mxu0 %v2374
        %v2487 = vpop.f32.mrf.mxu0
        %v2488 = vadd.f32 0.0, %v2487
        %v2489 = vpop.f32.mrf.mxu0
        %v2490 = vadd.f32 0.0, %v2489
        %2491 = vmatmul.bf16.gmra.mxu0 %v2376
        %v2492 = vpop.f32.mrf.mxu0
        %v2493 = vadd.f32 0.0, %v2492
        %v2494 = vpop.f32.mrf.mxu0
        %v2495 = vadd.f32 0.0, %v2494
        %2496 = vmatmul.bf16.gmra.mxu0 %v2378
        %v2497 = vpop.f32.mrf.mxu0
        %v2498 = vadd.f32 0.0, %v2497
        %v2499 = vpop.f32.mrf.mxu0
        %v2500 = vadd.f32 0.0, %v2499
        %2501 = vmatmul.bf16.gmra.mxu0 %v2380
        %v2502 = vpop.f32.mrf.mxu0
        %v2503 = vadd.f32 0.0, %v2502
        %v2504 = vpop.f32.mrf.mxu0
        %v2505 = vadd.f32 0.0, %v2504
        %2506 = vmatmul.bf16.gmra.mxu0 %v2382
        %v2507 = vpop.f32.mrf.mxu0
        %v2508 = vadd.f32 0.0, %v2507
        %v2509 = vpop.f32.mrf.mxu0
        %v2510 = vadd.f32 0.0, %v2509
        %2511 = vmatmul.bf16.gmra.mxu0 %v2384
        %v2512 = vpop.f32.mrf.mxu0
        %v2513 = vadd.f32 0.0, %v2512
        %v2514 = vpop.f32.mrf.mxu0
        %v2515 = vadd.f32 0.0, %v2514
        %2516 = vmatmul.bf16.gmra.mxu0 %v2386
        %v2517 = vpop.f32.mrf.mxu0
        %v2518 = vadd.f32 0.0, %v2517
        %v2519 = vpop.f32.mrf.mxu0
        %v2520 = vadd.f32 0.0, %v2519
        %2521 = vmatmul.bf16.gmra.mxu0 %v2388
        %v2522 = vpop.f32.mrf.mxu0
        %v2523 = vadd.f32 0.0, %v2522
        %v2524 = vpop.f32.mrf.mxu0
        %v2525 = vadd.f32 0.0, %v2524
        %2526 = vmatmul.bf16.gmra.mxu0 %v2390
        %v2527 = vpop.f32.mrf.mxu0
        %v2528 = vadd.f32 0.0, %v2527
        %v2529 = vpop.f32.mrf.mxu0
        %v2530 = vadd.f32 0.0, %v2529
        %2531 = vmatmul.bf16.gmra.mxu0 %v2392
        %v2532 = vpop.f32.mrf.mxu0
        %v2533 = vadd.f32 0.0, %v2532
        %v2534 = vpop.f32.mrf.mxu0
        %v2535 = vadd.f32 0.0, %v2534
        %2536 = vmatmul.bf16.gmra.mxu0 %v2394
        %v2537 = vpop.f32.mrf.mxu0
        %v2538 = vadd.f32 0.0, %v2537
        %v2539 = vpop.f32.mrf.mxu0
        %v2540 = vadd.f32 0.0, %v2539
        %2541 = vmatmul.bf16.gmra.mxu0 %v2396
        %v2542 = vpop.f32.mrf.mxu0
        %v2543 = vadd.f32 0.0, %v2542
        %v2544 = vpop.f32.mrf.mxu0
        %v2545 = vadd.f32 0.0, %v2544
        %2546 = vmatmul.bf16.gmra.mxu0 %v2398
        %v2547 = vpop.f32.mrf.mxu0
        %v2548 = vadd.f32 0.0, %v2547
        %v2549 = vpop.f32.mrf.mxu0
        %v2550 = vadd.f32 0.0, %v2549
        %2551 = vmatmul.bf16.gmra.mxu0 %v2400
        %v2552 = vpop.f32.mrf.mxu0
        %v2553 = vadd.f32 0.0, %v2552
        %v2554 = vpop.f32.mrf.mxu0
        %v2555 = vadd.f32 0.0, %v2554
        %2556 = vmatmul.bf16.gmra.mxu0 %v2402
        %v2557 = vpop.f32.mrf.mxu0
        %v2558 = vadd.f32 0.0, %v2557
        %v2559 = vpop.f32.mrf.mxu0
        %v2560 = vadd.f32 0.0, %v2559
        %2561 = vmatmul.bf16.gmra.mxu0 %v2404
        %v2562 = vpop.f32.mrf.mxu0
        %v2563 = vadd.f32 0.0, %v2562
        %v2564 = vpop.f32.mrf.mxu0
        %v2565 = vadd.f32 0.0, %v2564
        %2566 = vmatmul.bf16.gmra.mxu0 %v2406
        %v2567 = vpop.f32.mrf.mxu0
        %v2568 = vadd.f32 0.0, %v2567
        %v2569 = vpop.f32.mrf.mxu0
        %v2570 = vadd.f32 0.0, %v2569
        %2571 = vdwg.mxu0
        %v2572 = vadd.f32 %v2333, %v2483
        %v2573 = vadd.f32 %v2334, %v2485
        %v2574 = vadd.f32 %v2335, %v2488
        %v2575 = vadd.f32 %v2336, %v2490
        %v2576 = vadd.f32 %v2337, %v2493
        %v2577 = vadd.f32 %v2338, %v2495
        %v2578 = vadd.f32 %v2339, %v2498
        %v2579 = vadd.f32 %v2340, %v2500
        %v2580 = vadd.f32 %v2341, %v2503
        %v2581 = vadd.f32 %v2342, %v2505
        %v2582 = vadd.f32 %v2343, %v2508
        %v2583 = vadd.f32 %v2344, %v2510
        %v2584 = vadd.f32 %v2345, %v2513
        %v2585 = vadd.f32 %v2346, %v2515
        %v2586 = vadd.f32 %v2347, %v2518
        %v2587 = vadd.f32 %v2348, %v2520
        %v2588 = vadd.f32 %v2349, %v2523
        %v2589 = vadd.f32 %v2350, %v2525
        %v2590 = vadd.f32 %v2351, %v2528
        %v2591 = vadd.f32 %v2352, %v2530
        %v2592 = vadd.f32 %v2353, %v2533
        %v2593 = vadd.f32 %v2354, %v2535
        %v2594 = vadd.f32 %v2355, %v2538
        %v2595 = vadd.f32 %v2356, %v2540
        %v2596 = vadd.f32 %v2357, %v2543
        %v2597 = vadd.f32 %v2358, %v2545
        %v2598 = vadd.f32 %v2359, %v2548
        %v2599 = vadd.f32 %v2360, %v2550
        %v2600 = vadd.f32 %v2361, %v2553
        %v2601 = vadd.f32 %v2362, %v2555
        %v2602 = vadd.f32 %v2363, %v2558
        %v2603 = vadd.f32 %v2364, %v2560
        %v2604 = vadd.f32 %v2365, %v2563
        %v2605 = vadd.f32 %v2366, %v2565
        %v2606 = vadd.f32 %v2367, %v2568
        %v2607 = vadd.f32 %v2368, %v2570
        %v2609 = vperm.slane %v354, 0
        %v2611 = vadd.f32 %v2572, %v2609
        %v2612 = vadd.f32 %v2573, %v2609
        %v2613 = vadd.f32 %v2574, %v2609
        %v2614 = vadd.f32 %v2575, %v2609
        %v2615 = vadd.f32 %v2576, %v2609
        %v2616 = vadd.f32 %v2577, %v2609
        %v2617 = vadd.f32 %v2578, %v2609
        %v2618 = vadd.f32 %v2579, %v2609
        %v2619 = vadd.f32 %v2580, %v2609
        %v2620 = vadd.f32 %v2581, %v2609
        %v2621 = vadd.f32 %v2582, %v2609
        %v2622 = vadd.f32 %v2583, %v2609
        %v2623 = vadd.f32 %v2584, %v2609
        %v2624 = vadd.f32 %v2585, %v2609
        %v2625 = vadd.f32 %v2586, %v2609
        %v2626 = vadd.f32 %v2587, %v2609
        %v2627 = vadd.f32 %v2588, %v2609
        %v2628 = vadd.f32 %v2589, %v2609
        %v2629 = vadd.f32 %v2590, %v2609
        %v2630 = vadd.f32 %v2591, %v2609
        %v2631 = vadd.f32 %v2592, %v2609
        %v2632 = vadd.f32 %v2593, %v2609
        %v2633 = vadd.f32 %v2594, %v2609
        %v2634 = vadd.f32 %v2595, %v2609
        %v2635 = vadd.f32 %v2596, %v2609
        %v2636 = vadd.f32 %v2597, %v2609
        %v2637 = vadd.f32 %v2598, %v2609
        %v2638 = vadd.f32 %v2599, %v2609
        %v2639 = vadd.f32 %v2600, %v2609
        %v2640 = vadd.f32 %v2601, %v2609
        %v2641 = vadd.f32 %v2602, %v2609
        %v2642 = vadd.f32 %v2603, %v2609
        %v2643 = vadd.f32 %v2604, %v2609
        %v2644 = vadd.f32 %v2605, %v2609
        %v2645 = vadd.f32 %v2606, %v2609
        %v2646 = vadd.f32 %v2607, %v2609
        %v2647 = vpack.c.bf16 %v2611, %v2611
        %v2648 = vpack.c.bf16 %v2612, %v2612
        %v2649 = vpack.c.bf16 %v2613, %v2613
        %v2650 = vpack.c.bf16 %v2614, %v2614
        %v2651 = vpack.c.bf16 %v2615, %v2615
        %v2652 = vpack.c.bf16 %v2616, %v2616
        %v2653 = vpack.c.bf16 %v2617, %v2617
        %v2654 = vpack.c.bf16 %v2618, %v2618
        %v2655 = vpack.c.bf16 %v2619, %v2619
        %v2656 = vpack.c.bf16 %v2620, %v2620
        %v2657 = vpack.c.bf16 %v2621, %v2621
        %v2658 = vpack.c.bf16 %v2622, %v2622
        %v2659 = vpack.c.bf16 %v2623, %v2623
        %v2660 = vpack.c.bf16 %v2624, %v2624
        %v2661 = vpack.c.bf16 %v2625, %v2625
        %v2662 = vpack.c.bf16 %v2626, %v2626
        %v2663 = vpack.c.bf16 %v2627, %v2627
        %v2664 = vpack.c.bf16 %v2628, %v2628
        %v2665 = vpack.c.bf16 %v2629, %v2629
        %v2666 = vpack.c.bf16 %v2630, %v2630
        %v2667 = vpack.c.bf16 %v2631, %v2631
        %v2668 = vpack.c.bf16 %v2632, %v2632
        %v2669 = vpack.c.bf16 %v2633, %v2633
        %v2670 = vpack.c.bf16 %v2634, %v2634
        %v2671 = vpack.c.bf16 %v2635, %v2635
        %v2672 = vpack.c.bf16 %v2636, %v2636
        %v2673 = vpack.c.bf16 %v2637, %v2637
        %v2674 = vpack.c.bf16 %v2638, %v2638
        %v2675 = vpack.c.bf16 %v2639, %v2639
        %v2676 = vpack.c.bf16 %v2640, %v2640
        %v2677 = vpack.c.bf16 %v2641, %v2641
        %v2678 = vpack.c.bf16 %v2642, %v2642
        %v2679 = vpack.c.bf16 %v2643, %v2643
        %v2680 = vpack.c.bf16 %v2644, %v2644
        %v2681 = vpack.c.bf16 %v2645, %v2645
        %v2682 = vpack.c.bf16 %v2646, %v2646
        %2683 = vst [vmem:[%s163] sm:$0xf] %v2647
        %2684 = vst [vmem:[%s163 + $0x4] sm:$0xf] %v2648
        %2685 = vst [vmem:[%s163 + $0x8] sm:$0xf] %v2649
        %2686 = vst [vmem:[%s163 + $0xc] sm:$0xf] %v2650
        %2687 = vst [vmem:[%s163 + $0x10] sm:$0xf] %v2651
        %2688 = vst [vmem:[%s163 + $0x14] sm:$0xf] %v2652
        %2689 = vst [vmem:[%s163 + $0x18] sm:$0xf] %v2653
        %2690 = vst [vmem:[%s163 + $0x1c] sm:$0xf] %v2654
        %2691 = vst [vmem:[%s163 + $0x20] sm:$0xf] %v2655
        %2692 = vst [vmem:[%s163 + $0x24] sm:$0xf] %v2656
        %2693 = vst [vmem:[%s163 + $0x28] sm:$0xf] %v2657
        %2694 = vst [vmem:[%s163 + $0x2c] sm:$0xf] %v2658
        %2695 = vst [vmem:[%s163 + $0x30] sm:$0xf] %v2659
        %2696 = vst [vmem:[%s163 + $0x34] sm:$0xf] %v2660
        %2697 = vst [vmem:[%s163 + $0x38] sm:$0xf] %v2661
        %2698 = vst [vmem:[%s163 + $0x3c] sm:$0xf] %v2662
        %2699 = vst [vmem:[%s163 + $0x40] sm:$0xf] %v2663
        %2700 = vst [vmem:[%s163 + $0x44] sm:$0xf] %v2664
        %2701 = vst [vmem:[%s163 + $0x48] sm:$0xf] %v2665
        %2702 = vst [vmem:[%s163 + $0x4c] sm:$0xf] %v2666
        %2703 = vst [vmem:[%s163 + $0x50] sm:$0xf] %v2667
        %2704 = vst [vmem:[%s163 + $0x54] sm:$0xf] %v2668
        %2705 = vst [vmem:[%s163 + $0x58] sm:$0xf] %v2669
        %2706 = vst [vmem:[%s163 + $0x5c] sm:$0xf] %v2670
        %2707 = vst [vmem:[%s163 + $0x60] sm:$0xf] %v2671
        %2708 = vst [vmem:[%s163 + $0x64] sm:$0xf] %v2672
        %2709 = vst [vmem:[%s163 + $0x68] sm:$0xf] %v2673
        %2710 = vst [vmem:[%s163 + $0x6c] sm:$0xf] %v2674
        %2711 = vst [vmem:[%s163 + $0x70] sm:$0xf] %v2675
        %2712 = vst [vmem:[%s163 + $0x74] sm:$0xf] %v2676
        %2713 = vst [vmem:[%s163 + $0x78] sm:$0xf] %v2677
        %2714 = vst [vmem:[%s163 + $0x7c] sm:$0xf] %v2678
        %2715 = vst [vmem:[%s163 + $0x80] sm:$0xf] %v2679
        %2716 = vst [vmem:[%s163 + $0x84] sm:$0xf] %v2680
        %2717 = vst [vmem:[%s163 + $0x88] sm:$0xf] %v2681
        %2718 = vst [vmem:[%s163 + $0x8c] sm:$0xf] %v2682
        %s2719 = sand.u32 %s93, 1
        %s2720 = scalar_lea.sflag [#allocation3], %s2719
        %s2721 = sand.u32 %s93, 1
        %s2722 = smul.addr %s2721, 144
        %s2723 = scalar_lea.vmem [#allocation2], %s2722
        // Predicated region
        $region33: #{tpu_custom_call.1} parent=31 // pred_check
          %p2724 = pneg %p103
        $region34: #{tpu_custom_call.1} parent=31 // pred_check_branch
          %2726 = sbr.rel (%p2724) target = $region36
        $region35: #{tpu_custom_call.1} parent=31 // pred_region
          %2728 = vsyncadd %s2720, 0
          %s2729 = smul.addr %s17, 36
          %s2730 = smul.addr %s2729, 4
          %s2731 = scalar_lea.hbm %s3, %s2730
          %s2732 = sshll.u32 %s2723, 4
          %s2733 = int_to_ptr.vmem [resolvable:$true] %s2732
          %s2734 = sshll.u32 %s2731, 4
          %s2735 = int_to_ptr.hbm [resolvable:$true] %s2734
          %2740 = dma.vmem_to_hbm [thread:$0]  %s2733, 2304, %s2735, %s2720, 64, 64, 4
        $region36: #{tpu_custom_call.1} parent=31 // pred_fallthru
          _
      $region32: #{tpu_custom_call.1} parent=5 // pred_fallthru
        _
      %p2741 = scmp.le.s32.totalorder 2, %s12
      // Predicated region
      $region37: #{tpu_custom_call.1} parent=5 // pred_check
        %p2742 = pneg %p2741
      $region38: #{tpu_custom_call.1} parent=5 // pred_check_branch
        %2744 = sbr.rel (%p2742) target = $region40
      $region39: #{tpu_custom_call.1} parent=5 // pred_region
        %s2745 = ssub.s32 %s12, 2
        // Predicated region
        $region41: #{tpu_custom_call.1} parent=39 // pred_check
          %p2746 = pneg %p109
        $region42: #{tpu_custom_call.1} parent=39 // pred_check_branch
          %2748 = sbr.rel (%p2746) target = $region44
        $region43: #{tpu_custom_call.1} parent=39 // pred_region
          %s2749 = sand.u32 %s94, 1
          %s2750 = scalar_lea.sflag [#allocation3], %s2749
          %s2751 = sand.u32 %s94, 1
          %s2752 = smul.addr %s2751, 144
          %s2753 = scalar_lea.vmem [#allocation2], %s2752
          %2755 = dma.done %s2750, 2304
        $region44: #{tpu_custom_call.1} parent=39 // pred_fallthru
          _
      $region40: #{tpu_custom_call.1} parent=5 // pred_fallthru
        _
    $region6: #{tpu_custom_call.1} parent=1 // loop_footer
      %s16 = sadd.s32 1, %s12
    $region7: #{tpu_custom_call.1} parent=1 // loop_footer_branch
      %11 = sbr.rel target = $region3
    $region8: #{tpu_custom_call.1} parent=1 // loop_exit
      _
    %2756 = vsyncpa [#allocation3], 1
    %s2757 = scalar_lea.sflag [#allocation3], 1
    %2758 = vsyncpa %s2757, 1

</llo_original>
